<compile_context>
chip_gen: v6e
topology: v6e:2x2x1
jax: 0.10.0
libtpu: 0.0.40
codegen_flags: <defaults>
</compile_context>

<pallas_src>
import functools

import jax
import jax.numpy as jnp
from jax.experimental import pallas as pl
from jax.experimental.pallas import tpu as pltpu


_GOLD = 0x9E3779B9


def _splitmix32(x):
    """Bijective 32-bit mixer (splitmix32-style finalizer) on uint32 arrays."""
    x = x * jnp.uint32(_GOLD)
    x = (x ^ (x >> 16)) * jnp.uint32(0x21F0AAAD)
    x = (x ^ (x >> 15)) * jnp.uint32(0x735A2D97)
    x = x ^ (x >> 15)
    return x


def _add_noise_kernel(seed_ref, x_ref, o_ref, *, noise_level):
    block_rows, lane_w = x_ref.shape
    half = block_rows // 2  # block_rows is a multiple of 16 -> half is 8-aligned

    i = pl.program_id(0)
    salt = seed_ref[0].astype(jnp.uint32)

    # Unique pair counter per (block, row-in-half, lane).
    rows_i = jax.lax.broadcasted_iota(jnp.int32, (half, lane_w), 0)
    cols_i = jax.lax.broadcasted_iota(jnp.int32, (half, lane_w), 1)
    ctr = ((i * half + rows_i) * lane_w + cols_i).astype(jnp.uint32)

    # Counter-based RNG: two decorrelated uniform draws per pair.
    h1 = _splitmix32(ctr + salt * jnp.uint32(_GOLD))
    h2 = _splitmix32(h1 + jnp.uint32(_GOLD))

    inv24 = jnp.float32(1.0 / 16777216.0)
    # u1 in (0, 1] (log finite), u2 in [0, 1).
    u1 = ((h1 >> 8).astype(jnp.int32).astype(jnp.float32) + 1.0) * inv24
    u2 = (h2 >> 8).astype(jnp.int32).astype(jnp.float32) * inv24

    # Box-Muller, using BOTH outputs: z1 -> first half rows, z2 -> second half.
    r = jnp.sqrt(-2.0 * jnp.log(u1))
    theta = jnp.float32(6.283185307179586) * u2
    z1 = r * jnp.cos(theta)
    z2 = r * jnp.sin(theta)

    nl = jnp.float32(noise_level)
    o_ref[0:half, :] = x_ref[0:half, :] + z1 * nl
    o_ref[half:block_rows, :] = x_ref[half:block_rows, :] + z2 * nl


def _round_up(a, b):
    return (a + b - 1) // b * b


def add_random_noise(x, seed, noise_level=0.005, *,
                     lane_width=1024, max_block_rows=512):
    """Pallas TPU implementation of AddRandomNoise.forward.

    x: array of arbitrary shape (e.g. NCHW).  Output has same shape/dtype.
    seed: int scalar seeding the counter-based in-kernel RNG.
    """
    orig_shape = x.shape
    orig_dtype = x.dtype
    total = x.size
    lane_w = lane_width

    rows = max(1, -(-total // lane_w))
    # Multiple of 16 so both Box-Muller halves are 8-sublane aligned;
    # cap at max_block_rows (512 rows x 1024 lanes x f32 = 2 MiB block).
    block_rows = min(max_block_rows, _round_up(rows, 16))
    rows_padded = _round_up(rows, block_rows)
    padded_total = rows_padded * lane_w

    xf = x.reshape(-1).astype(jnp.float32)
    if padded_total != total:
        xf = jnp.pad(xf, (0, padded_total - total))
    x2d = xf.reshape(rows_padded, lane_w)
    seed_arr = jnp.asarray([seed], dtype=jnp.int32)

    kernel = functools.partial(_add_noise_kernel, noise_level=float(noise_level))

    cost = pl.CostEstimate(
        flops=12 * padded_total,
        transcendentals=2 * padded_total,
        bytes_accessed=8 * padded_total,
    )

    out2d = pl.pallas_call(
        kernel,
        out_shape=jax.ShapeDtypeStruct((rows_padded, lane_w), jnp.float32),
        grid_spec=pltpu.PrefetchScalarGridSpec(
            num_scalar_prefetch=1,
            grid=(rows_padded // block_rows,),
            in_specs=[
                pl.BlockSpec((block_rows, lane_w), lambda i, seed: (i, 0)),
            ],
            out_specs=pl.BlockSpec((block_rows, lane_w), lambda i, seed: (i, 0)),
        ),
        compiler_params=pltpu.CompilerParams(
            # Every block reseeds from (seed, block index): no sequential
            # dependency, so v7x can split the grid across both TensorCores.
            dimension_semantics=("parallel",),
        ),
        cost_estimate=cost,
    )(seed_arr, x2d)

    out = out2d.reshape(-1)[:total].reshape(orig_shape)
    return out.astype(orig_dtype)


if __name__ == "__main__":
    key = jax.random.PRNGKey(0)
    # NCHW-style input, small shape: batch=2, channels=4, 16x16 spatial.
    x = jax.random.normal(key, (2, 4, 16, 16), dtype=jnp.float32)

    noise_level = 0.005
    y = add_random_noise(x, seed=1234, noise_level=noise_level)
    y = jax.block_until_ready(y)

    # Sanity checks: shape/dtype preserved, perturbation magnitude ~ noise_level.
    assert y.shape == x.shape
    assert y.dtype == x.dtype
    diff = y - x
    max_abs = float(jnp.max(jnp.abs(diff)))
    std = float(jnp.std(diff))
    mean = float(jnp.mean(diff))
    assert max_abs > 0.0, "noise was not added"
    assert max_abs < 10.0 * noise_level, "noise magnitude too large"
    assert 0.5 * noise_level < std < 2.0 * noise_level, "noise std off-scale"
    assert abs(mean) < noise_level, "noise not zero-mean"

    print("KERNEL_OK")
</pallas_src>

<mosaic_0001>
module attributes {stable_mosaic.version = 11 : i64} {
  func.func @_add_noise_kernel(%arg0: i32, %arg1: memref<1xi32, #tpu.memory_space<smem>>, %arg2: memref<16x1024xf32, #tpu.memory_space<vmem>>, %arg3: memref<16x1024xf32, #tpu.memory_space<vmem>>) attributes {dimension_semantics = [#tpu.dimension_semantics<parallel>], iteration_bounds = array<i64: 1>, scalar_prefetch = 1 : i64, scratch_operands = 0 : i64, tpu.core_type = #tpu.core_type<tc>, window_params = [{transform_indices = @transform_0, window_bounds = array<i64: 16, 1024>}, {transform_indices = @transform_1, window_bounds = array<i64: 16, 1024>}]} {
    %c0 = arith.constant 0 : index
    %0 = memref.load %arg1[%c0] : memref<1xi32, #tpu.memory_space<smem>>
    %1 = tpu.iota {dimensions = array<i32: 0>} : vector<8x1024xi32>
    %2 = tpu.iota {dimensions = array<i32: 1>} : vector<8x1024xi32>
    %c8_i32 = arith.constant 8 : i32
    %3 = arith.muli %arg0, %c8_i32 : i32
    %4 = vector.broadcast %3 : i32 to vector<8x1024xi32>
    %5 = arith.addi %4, %1 : vector<8x1024xi32>
    %c1024_i32 = arith.constant 1024 : i32
    %6 = vector.broadcast %c1024_i32 : i32 to vector<8x1024xi32>
    %7 = arith.muli %5, %6 : vector<8x1024xi32>
    %8 = arith.addi %7, %2 : vector<8x1024xi32>
    %c-1640531527_i32 = arith.constant -1640531527 : i32
    %9 = arith.muli %0, %c-1640531527_i32 : i32
    %10 = vector.broadcast %9 : i32 to vector<8x1024xi32>
    %11 = arith.addi %8, %10 : vector<8x1024xi32>
    %c-1640531527_i32_0 = arith.constant -1640531527 : i32
    %12 = vector.broadcast %c-1640531527_i32_0 : i32 to vector<8x1024xi32>
    %13 = arith.muli %11, %12 : vector<8x1024xi32>
    %c16_i32 = arith.constant 16 : i32
    %14 = vector.broadcast %c16_i32 : i32 to vector<8x1024xi32>
    %15 = arith.shrui %13, %14 : vector<8x1024xi32>
    %16 = arith.xori %13, %15 : vector<8x1024xi32>
    %c569420461_i32 = arith.constant 569420461 : i32
    %17 = vector.broadcast %c569420461_i32 : i32 to vector<8x1024xi32>
    %18 = arith.muli %16, %17 : vector<8x1024xi32>
    %c15_i32 = arith.constant 15 : i32
    %19 = vector.broadcast %c15_i32 : i32 to vector<8x1024xi32>
    %20 = arith.shrui %18, %19 : vector<8x1024xi32>
    %21 = arith.xori %18, %20 : vector<8x1024xi32>
    %c1935289751_i32 = arith.constant 1935289751 : i32
    %22 = vector.broadcast %c1935289751_i32 : i32 to vector<8x1024xi32>
    %23 = arith.muli %21, %22 : vector<8x1024xi32>
    %c15_i32_1 = arith.constant 15 : i32
    %24 = vector.broadcast %c15_i32_1 : i32 to vector<8x1024xi32>
    %25 = arith.shrui %23, %24 : vector<8x1024xi32>
    %26 = arith.xori %23, %25 : vector<8x1024xi32>
    %c-1640531527_i32_2 = arith.constant -1640531527 : i32
    %27 = vector.broadcast %c-1640531527_i32_2 : i32 to vector<8x1024xi32>
    %28 = arith.addi %26, %27 : vector<8x1024xi32>
    %c-1640531527_i32_3 = arith.constant -1640531527 : i32
    %29 = vector.broadcast %c-1640531527_i32_3 : i32 to vector<8x1024xi32>
    %30 = arith.muli %28, %29 : vector<8x1024xi32>
    %c16_i32_4 = arith.constant 16 : i32
    %31 = vector.broadcast %c16_i32_4 : i32 to vector<8x1024xi32>
    %32 = arith.shrui %30, %31 : vector<8x1024xi32>
    %33 = arith.xori %30, %32 : vector<8x1024xi32>
    %c569420461_i32_5 = arith.constant 569420461 : i32
    %34 = vector.broadcast %c569420461_i32_5 : i32 to vector<8x1024xi32>
    %35 = arith.muli %33, %34 : vector<8x1024xi32>
    %c15_i32_6 = arith.constant 15 : i32
    %36 = vector.broadcast %c15_i32_6 : i32 to vector<8x1024xi32>
    %37 = arith.shrui %35, %36 : vector<8x1024xi32>
    %38 = arith.xori %35, %37 : vector<8x1024xi32>
    %c1935289751_i32_7 = arith.constant 1935289751 : i32
    %39 = vector.broadcast %c1935289751_i32_7 : i32 to vector<8x1024xi32>
    %40 = arith.muli %38, %39 : vector<8x1024xi32>
    %c15_i32_8 = arith.constant 15 : i32
    %41 = vector.broadcast %c15_i32_8 : i32 to vector<8x1024xi32>
    %42 = arith.shrui %40, %41 : vector<8x1024xi32>
    %43 = arith.xori %40, %42 : vector<8x1024xi32>
    %c8_i32_9 = arith.constant 8 : i32
    %44 = vector.broadcast %c8_i32_9 : i32 to vector<8x1024xi32>
    %45 = arith.shrui %26, %44 : vector<8x1024xi32>
    %46 = arith.sitofp %45 : vector<8x1024xi32> to vector<8x1024xf32>
    %cst = arith.constant 1.000000e+00 : f32
    %47 = vector.broadcast %cst : f32 to vector<8x1024xf32>
    %48 = arith.addf %46, %47 : vector<8x1024xf32>
    %cst_10 = arith.constant 5.96046448E-8 : f32
    %49 = vector.broadcast %cst_10 : f32 to vector<8x1024xf32>
    %50 = arith.mulf %48, %49 : vector<8x1024xf32>
    %c8_i32_11 = arith.constant 8 : i32
    %51 = vector.broadcast %c8_i32_11 : i32 to vector<8x1024xi32>
    %52 = arith.shrui %43, %51 : vector<8x1024xi32>
    %53 = arith.sitofp %52 : vector<8x1024xi32> to vector<8x1024xf32>
    %cst_12 = arith.constant 5.96046448E-8 : f32
    %54 = vector.broadcast %cst_12 : f32 to vector<8x1024xf32>
    %55 = arith.mulf %53, %54 : vector<8x1024xf32>
    %56 = math.log %50 : vector<8x1024xf32>
    %cst_13 = arith.constant -2.000000e+00 : f32
    %57 = vector.broadcast %cst_13 : f32 to vector<8x1024xf32>
    %58 = arith.mulf %57, %56 : vector<8x1024xf32>
    %59 = math.sqrt %58 : vector<8x1024xf32>
    %cst_14 = arith.constant 6.28318548 : f32
    %60 = vector.broadcast %cst_14 : f32 to vector<8x1024xf32>
    %61 = arith.mulf %60, %55 : vector<8x1024xf32>
    %62 = math.cos %61 : vector<8x1024xf32>
    %63 = arith.mulf %59, %62 : vector<8x1024xf32>
    %64 = math.sin %61 : vector<8x1024xf32>
    %65 = arith.mulf %59, %64 : vector<8x1024xf32>
    %c0_15 = arith.constant 0 : index
    %c0_16 = arith.constant 0 : index
    %66 = vector.load %arg2[%c0_15, %c0_16] : memref<16x1024xf32, #tpu.memory_space<vmem>>, vector<8x1024xf32>
    %cst_17 = arith.constant 5.000000e-03 : f32
    %67 = vector.broadcast %cst_17 : f32 to vector<8x1024xf32>
    %68 = arith.mulf %63, %67 : vector<8x1024xf32>
    %69 = arith.addf %66, %68 : vector<8x1024xf32>
    %c0_18 = arith.constant 0 : index
    %c0_19 = arith.constant 0 : index
    %70 = vector.load %arg3[%c0_18, %c0_19] : memref<16x1024xf32, #tpu.memory_space<vmem>>, vector<8x1024xf32>
    tpu.vector_store %arg3[%c0_18, %c0_19], %69 {strides = array<i32>} : memref<16x1024xf32, #tpu.memory_space<vmem>>, vector<8x1024xf32>,
    %c8 = arith.constant 8 : index
    %c0_20 = arith.constant 0 : index
    %71 = vector.load %arg2[%c8, %c0_20] : memref<16x1024xf32, #tpu.memory_space<vmem>>, vector<8x1024xf32>
    %cst_21 = arith.constant 5.000000e-03 : f32
    %72 = vector.broadcast %cst_21 : f32 to vector<8x1024xf32>
    %73 = arith.mulf %65, %72 : vector<8x1024xf32>
    %74 = arith.addf %71, %73 : vector<8x1024xf32>
    %c8_22 = arith.constant 8 : index
    %c0_23 = arith.constant 0 : index
    %75 = vector.load %arg3[%c8_22, %c0_23] : memref<16x1024xf32, #tpu.memory_space<vmem>>, vector<8x1024xf32>
    tpu.vector_store %arg3[%c8_22, %c0_23], %74 {strides = array<i32>} : memref<16x1024xf32, #tpu.memory_space<vmem>>, vector<8x1024xf32>,
    return
  }
  func.func @transform_0(%arg0: i32, %arg1: memref<1xi32, #tpu.memory_space<smem>>) -> (i32, i32) {
    %c0_i32 = arith.constant 0 : i32
    %c0_i32_0 = arith.constant 0 : i32
    return %arg0, %c0_i32 : i32, i32
  }
  func.func @transform_1(%arg0: i32, %arg1: memref<1xi32, #tpu.memory_space<smem>>) -> (i32, i32) {
    %c0_i32 = arith.constant 0 : i32
    %c0_i32_0 = arith.constant 0 : i32
    return %arg0, %c0_i32 : i32, i32
  }
}

</mosaic_0001>

<llo_original>
// kernel: tpu_custom_call.1
$region0: #{tpu_custom_call.1}
  #allocation0 [shape = 'u32[]', space=smem, size = 0x4, offset = 0x4, fixed_abs, tag = 'smem constant byte address 0x4 - core index']
  #allocation1 [shape = 'u32[144,128]{1,0:T(1,128)}', space=vmem, size = 0x12000, scoped, tag = 'internal scratch']
  #allocation2 [shape = 's32[1]{0}', space=sflag, size = 0x4, scoped, tag = 'scoped memory for tpu_custom_call.1']
  #allocation3 [shape = 's32[1]{0:T(128)S(6)}', space=smem, size = 0x200, scoped, tag = 'prefetched SMEM operand 0']
  %s0 = inlined_call_operand.<no memory space> [shape: s32[1], index: 0, kind: input, shape index: {}]
  %s1 = inlined_call_operand.hbm [shape: f32[16,1024], index: 1, kind: input, shape index: {}]
  %s2 = inlined_call_operand.hbm [shape: f32[16,1024], index: 2, kind: output, shape index: {}]
  %s3 = sld [smem:[#allocation0]]
  $region18: #{tpu_custom_call.1} parent=0
    _
  %s5 = ssub.s32 1, %s3
  %s6 = scalar_select 0, %s5, %s3
  %7 = sst [smem:[#allocation3]] %s0
  $region1: #{tpu_custom_call.1} parent=0
    #allocation4 [shape = 'u8[65536]{0}', space=vmem, size = 0x10000, scoped, tag = 'input window, operand 1, single buffered']
    #allocation5 [shape = 's32[1]{0}', space=sflag, size = 0x4, scoped, tag = 'scoped memory for tpu_custom_call.1']
    #allocation6 [shape = 's32[1]{0}', space=sflag, size = 0x4, scoped, tag = 'scoped memory for tpu_custom_call.1']
    #allocation7 [shape = 'u8[65536]{0}', space=vmem, size = 0x10000, scoped, tag = 'output window, operand 0, single buffered']
    %8 = vsyncpa [#allocation5], 0
    %9 = vsyncpa [#allocation6], 0
    // Predicated region
    $region2: #{tpu_custom_call.1} parent=1 // pred_check
      _
    $region3: #{tpu_custom_call.1} parent=1 // pred_check_branch
      %11 = sbr.rel (0) target = $region5
    $region4: #{tpu_custom_call.1} parent=1 // pred_region
      %s13 = ssub.s32 2048, 2048
      %14 = vsyncadd [#allocation5], %s13
      %s15 = sshll.u32 [#allocation4], 4
      %s16 = int_to_ptr.vmem [resolvable:$true] %s15
      %21 = dma.hbm_to_vmem [thread:$0]  %s1, 2048, %s16, [#allocation5], 1024, 1024, 64
    $region5: #{tpu_custom_call.1} parent=1 // pred_fallthru
      _
    // Predicated region
    $region6: #{tpu_custom_call.1} parent=1 // pred_check
      _
    $region7: #{tpu_custom_call.1} parent=1 // pred_check_branch
      %23 = sbr.rel (0) target = $region9
    $region8: #{tpu_custom_call.1} parent=1 // pred_region
      %24 = dma.done [#allocation5], 2048
    $region9: #{tpu_custom_call.1} parent=1 // pred_fallthru
      _
    %s25 = sld [smem:[#allocation3]]
    %v26 = vlaneseq
    %v27 = vshrl.u32 %v26, 7
    %v28 = vlaneseq
    %v29 = vand.u32 %v28, 127
    %v30 = vadd.s32 %v29, 128
    %v31 = vadd.s32 %v29, 256
    %v32 = vadd.s32 %v29, 384
    %v33 = vadd.s32 %v29, 512
    %v34 = vadd.s32 %v29, 640
    %v35 = vadd.s32 %v29, 768
    %v36 = vadd.s32 %v29, 896
    %s37 = smul.u32 0, 8
    %v38 = vstv %s37
    %v39 = vadd.s32 %v38, %v27
    %v40 = vmul.u32 %v39, 1024
    %v41 = vadd.s32 %v40, %v29
    %v42 = vadd.s32 %v40, %v30
    %v43 = vadd.s32 %v40, %v31
    %v44 = vadd.s32 %v40, %v32
    %v45 = vadd.s32 %v40, %v33
    %v46 = vadd.s32 %v40, %v34
    %v47 = vadd.s32 %v40, %v35
    %v48 = vadd.s32 %v40, %v36
    %s49 = smul.u32 %s25, 2654435769
    %v50 = vstv %s49
    %v51 = vadd.s32 %v41, %v50
    %v52 = vadd.s32 %v42, %v50
    %v53 = vadd.s32 %v43, %v50
    %v54 = vadd.s32 %v44, %v50
    %v55 = vadd.s32 %v45, %v50
    %v56 = vadd.s32 %v46, %v50
    %v57 = vadd.s32 %v47, %v50
    %v58 = vadd.s32 %v48, %v50
    %v59 = vmul.u32 %v51, 2654435769
    %v60 = vmul.u32 %v52, 2654435769
    %v61 = vmul.u32 %v53, 2654435769
    %v62 = vmul.u32 %v54, 2654435769
    %v63 = vmul.u32 %v55, 2654435769
    %v64 = vmul.u32 %v56, 2654435769
    %v65 = vmul.u32 %v57, 2654435769
    %v66 = vmul.u32 %v58, 2654435769
    %v67 = vshrl.u32 %v59, 16
    %v68 = vshrl.u32 %v60, 16
    %v69 = vshrl.u32 %v61, 16
    %v70 = vshrl.u32 %v62, 16
    %v71 = vshrl.u32 %v63, 16
    %v72 = vshrl.u32 %v64, 16
    %v73 = vshrl.u32 %v65, 16
    %v74 = vshrl.u32 %v66, 16
    %v75 = vxor.u32 %v59, %v67
    %v76 = vxor.u32 %v60, %v68
    %v77 = vxor.u32 %v61, %v69
    %v78 = vxor.u32 %v62, %v70
    %v79 = vxor.u32 %v63, %v71
    %v80 = vxor.u32 %v64, %v72
    %v81 = vxor.u32 %v65, %v73
    %v82 = vxor.u32 %v66, %v74
    %v83 = vmul.u32 %v75, 569420461
    %v84 = vmul.u32 %v76, 569420461
    %v85 = vmul.u32 %v77, 569420461
    %v86 = vmul.u32 %v78, 569420461
    %v87 = vmul.u32 %v79, 569420461
    %v88 = vmul.u32 %v80, 569420461
    %v89 = vmul.u32 %v81, 569420461
    %v90 = vmul.u32 %v82, 569420461
    %v91 = vshrl.u32 %v83, 15
    %v92 = vshrl.u32 %v84, 15
    %v93 = vshrl.u32 %v85, 15
    %v94 = vshrl.u32 %v86, 15
    %v95 = vshrl.u32 %v87, 15
    %v96 = vshrl.u32 %v88, 15
    %v97 = vshrl.u32 %v89, 15
    %v98 = vshrl.u32 %v90, 15
    %v99 = vxor.u32 %v83, %v91
    %v100 = vxor.u32 %v84, %v92
    %v101 = vxor.u32 %v85, %v93
    %v102 = vxor.u32 %v86, %v94
    %v103 = vxor.u32 %v87, %v95
    %v104 = vxor.u32 %v88, %v96
    %v105 = vxor.u32 %v89, %v97
    %v106 = vxor.u32 %v90, %v98
    %v107 = vmul.u32 %v99, 1935289751
    %v108 = vmul.u32 %v100, 1935289751
    %v109 = vmul.u32 %v101, 1935289751
    %v110 = vmul.u32 %v102, 1935289751
    %v111 = vmul.u32 %v103, 1935289751
    %v112 = vmul.u32 %v104, 1935289751
    %v113 = vmul.u32 %v105, 1935289751
    %v114 = vmul.u32 %v106, 1935289751
    %v115 = vshrl.u32 %v107, 15
    %v116 = vshrl.u32 %v108, 15
    %v117 = vshrl.u32 %v109, 15
    %v118 = vshrl.u32 %v110, 15
    %v119 = vshrl.u32 %v111, 15
    %v120 = vshrl.u32 %v112, 15
    %v121 = vshrl.u32 %v113, 15
    %v122 = vshrl.u32 %v114, 15
    %v123 = vxor.u32 %v107, %v115
    %v124 = vxor.u32 %v108, %v116
    %v125 = vxor.u32 %v109, %v117
    %v126 = vxor.u32 %v110, %v118
    %v127 = vxor.u32 %v111, %v119
    %v128 = vxor.u32 %v112, %v120
    %v129 = vxor.u32 %v113, %v121
    %v130 = vxor.u32 %v114, %v122
    %v131 = vadd.s32 %v123, 2654435769
    %v132 = vadd.s32 %v124, 2654435769
    %v133 = vadd.s32 %v125, 2654435769
    %v134 = vadd.s32 %v126, 2654435769
    %v135 = vadd.s32 %v127, 2654435769
    %v136 = vadd.s32 %v128, 2654435769
    %v137 = vadd.s32 %v129, 2654435769
    %v138 = vadd.s32 %v130, 2654435769
    %v139 = vmul.u32 %v131, 2654435769
    %v140 = vmul.u32 %v132, 2654435769
    %v141 = vmul.u32 %v133, 2654435769
    %v142 = vmul.u32 %v134, 2654435769
    %v143 = vmul.u32 %v135, 2654435769
    %v144 = vmul.u32 %v136, 2654435769
    %v145 = vmul.u32 %v137, 2654435769
    %v146 = vmul.u32 %v138, 2654435769
    %v147 = vshrl.u32 %v139, 16
    %v148 = vshrl.u32 %v140, 16
    %v149 = vshrl.u32 %v141, 16
    %v150 = vshrl.u32 %v142, 16
    %v151 = vshrl.u32 %v143, 16
    %v152 = vshrl.u32 %v144, 16
    %v153 = vshrl.u32 %v145, 16
    %v154 = vshrl.u32 %v146, 16
    %v155 = vxor.u32 %v139, %v147
    %v156 = vxor.u32 %v140, %v148
    %v157 = vxor.u32 %v141, %v149
    %v158 = vxor.u32 %v142, %v150
    %v159 = vxor.u32 %v143, %v151
    %v160 = vxor.u32 %v144, %v152
    %v161 = vxor.u32 %v145, %v153
    %v162 = vxor.u32 %v146, %v154
    %v163 = vmul.u32 %v155, 569420461
    %v164 = vmul.u32 %v156, 569420461
    %v165 = vmul.u32 %v157, 569420461
    %v166 = vmul.u32 %v158, 569420461
    %v167 = vmul.u32 %v159, 569420461
    %v168 = vmul.u32 %v160, 569420461
    %v169 = vmul.u32 %v161, 569420461
    %v170 = vmul.u32 %v162, 569420461
    %v171 = vshrl.u32 %v163, 15
    %v172 = vshrl.u32 %v164, 15
    %v173 = vshrl.u32 %v165, 15
    %v174 = vshrl.u32 %v166, 15
    %v175 = vshrl.u32 %v167, 15
    %v176 = vshrl.u32 %v168, 15
    %v177 = vshrl.u32 %v169, 15
    %v178 = vshrl.u32 %v170, 15
    %v179 = vxor.u32 %v163, %v171
    %v180 = vxor.u32 %v164, %v172
    %v181 = vxor.u32 %v165, %v173
    %v182 = vxor.u32 %v166, %v174
    %v183 = vxor.u32 %v167, %v175
    %v184 = vxor.u32 %v168, %v176
    %v185 = vxor.u32 %v169, %v177
    %v186 = vxor.u32 %v170, %v178
    %v187 = vmul.u32 %v179, 1935289751
    %v188 = vmul.u32 %v180, 1935289751
    %v189 = vmul.u32 %v181, 1935289751
    %v190 = vmul.u32 %v182, 1935289751
    %v191 = vmul.u32 %v183, 1935289751
    %v192 = vmul.u32 %v184, 1935289751
    %v193 = vmul.u32 %v185, 1935289751
    %v194 = vmul.u32 %v186, 1935289751
    %v195 = vshrl.u32 %v187, 15
    %v196 = vshrl.u32 %v188, 15
    %v197 = vshrl.u32 %v189, 15
    %v198 = vshrl.u32 %v190, 15
    %v199 = vshrl.u32 %v191, 15
    %v200 = vshrl.u32 %v192, 15
    %v201 = vshrl.u32 %v193, 15
    %v202 = vshrl.u32 %v194, 15
    %v203 = vxor.u32 %v187, %v195
    %v204 = vxor.u32 %v188, %v196
    %v205 = vxor.u32 %v189, %v197
    %v206 = vxor.u32 %v190, %v198
    %v207 = vxor.u32 %v191, %v199
    %v208 = vxor.u32 %v192, %v200
    %v209 = vxor.u32 %v193, %v201
    %v210 = vxor.u32 %v194, %v202
    %v211 = vshrl.u32 %v123, 8
    %v212 = vshrl.u32 %v124, 8
    %v213 = vshrl.u32 %v125, 8
    %v214 = vshrl.u32 %v126, 8
    %v215 = vshrl.u32 %v127, 8
    %v216 = vshrl.u32 %v128, 8
    %v217 = vshrl.u32 %v129, 8
    %v218 = vshrl.u32 %v130, 8
    %v219 = vcvt.s32.f32 %v211
    %v220 = vcvt.s32.f32 %v212
    %v221 = vcvt.s32.f32 %v213
    %v222 = vcvt.s32.f32 %v214
    %v223 = vcvt.s32.f32 %v215
    %v224 = vcvt.s32.f32 %v216
    %v225 = vcvt.s32.f32 %v217
    %v226 = vcvt.s32.f32 %v218
    %v227 = vadd.f32 %v219, 1.0
    %v228 = vadd.f32 %v220, 1.0
    %v229 = vadd.f32 %v221, 1.0
    %v230 = vadd.f32 %v222, 1.0
    %v231 = vadd.f32 %v223, 1.0
    %v232 = vadd.f32 %v224, 1.0
    %v233 = vadd.f32 %v225, 1.0
    %v234 = vadd.f32 %v226, 1.0
    %v235 = vmul.f32 %v227, 5.9604645e-08
    %v236 = vmul.f32 %v228, 5.9604645e-08
    %v237 = vmul.f32 %v229, 5.9604645e-08
    %v238 = vmul.f32 %v230, 5.9604645e-08
    %v239 = vmul.f32 %v231, 5.9604645e-08
    %v240 = vmul.f32 %v232, 5.9604645e-08
    %v241 = vmul.f32 %v233, 5.9604645e-08
    %v242 = vmul.f32 %v234, 5.9604645e-08
    %v243 = vshrl.u32 %v203, 8
    %v244 = vshrl.u32 %v204, 8
    %v245 = vshrl.u32 %v205, 8
    %v246 = vshrl.u32 %v206, 8
    %v247 = vshrl.u32 %v207, 8
    %v248 = vshrl.u32 %v208, 8
    %v249 = vshrl.u32 %v209, 8
    %v250 = vshrl.u32 %v210, 8
    %v251 = vcvt.s32.f32 %v243
    %v252 = vcvt.s32.f32 %v244
    %v253 = vcvt.s32.f32 %v245
    %v254 = vcvt.s32.f32 %v246
    %v255 = vcvt.s32.f32 %v247
    %v256 = vcvt.s32.f32 %v248
    %v257 = vcvt.s32.f32 %v249
    %v258 = vcvt.s32.f32 %v250
    %v259 = vmul.f32 %v251, 5.9604645e-08
    %v260 = vmul.f32 %v252, 5.9604645e-08
    %v261 = vmul.f32 %v253, 5.9604645e-08
    %v262 = vmul.f32 %v254, 5.9604645e-08
    %v263 = vmul.f32 %v255, 5.9604645e-08
    %v264 = vmul.f32 %v256, 5.9604645e-08
    %v265 = vmul.f32 %v257, 5.9604645e-08
    %v266 = vmul.f32 %v258, 5.9604645e-08
    %v267 = vlog2.pop %v235
    %v268 = vmul.f32 %v267, 0.6931472
    %v269 = vlog2.pop %v236
    %v270 = vmul.f32 %v269, 0.6931472
    %v271 = vlog2.pop %v237
    %v272 = vmul.f32 %v271, 0.6931472
    %v273 = vlog2.pop %v238
    %v274 = vmul.f32 %v273, 0.6931472
    %v275 = vlog2.pop %v239
    %v276 = vmul.f32 %v275, 0.6931472
    %v277 = vlog2.pop %v240
    %v278 = vmul.f32 %v277, 0.6931472
    %v279 = vlog2.pop %v241
    %v280 = vmul.f32 %v279, 0.6931472
    %v281 = vlog2.pop %v242
    %v282 = vmul.f32 %v281, 0.6931472
    %v283 = vmul.f32 %v268, -2.0
    %v284 = vmul.f32 %v270, -2.0
    %v285 = vmul.f32 %v272, -2.0
    %v286 = vmul.f32 %v274, -2.0
    %v287 = vmul.f32 %v276, -2.0
    %v288 = vmul.f32 %v278, -2.0
    %v289 = vmul.f32 %v280, -2.0
    %v290 = vmul.f32 %v282, -2.0
    %v291 = vrsqrt.pop %v283
    %v292 = vmul.f32 %v283, %v291
    %vm293 = vcmp.eq.f32.partialorder %v283, inf
    %v294 = vsel %vm293, %v283, %v292
    %vm295 = vcmp.eq.f32.partialorder %v283, 0.0
    %v296 = vand.u32 %v283, 2147483648
    %v297 = vsel %vm295, %v296, %v294
    %v298 = vrsqrt.pop %v284
    %v299 = vmul.f32 %v284, %v298
    %vm300 = vcmp.eq.f32.partialorder %v284, inf
    %v301 = vsel %vm300, %v284, %v299
    %vm302 = vcmp.eq.f32.partialorder %v284, 0.0
    %v303 = vand.u32 %v284, 2147483648
    %v304 = vsel %vm302, %v303, %v301
    %v305 = vrsqrt.pop %v285
    %v306 = vmul.f32 %v285, %v305
    %vm307 = vcmp.eq.f32.partialorder %v285, inf
    %v308 = vsel %vm307, %v285, %v306
    %vm309 = vcmp.eq.f32.partialorder %v285, 0.0
    %v310 = vand.u32 %v285, 2147483648
    %v311 = vsel %vm309, %v310, %v308
    %v312 = vrsqrt.pop %v286
    %v313 = vmul.f32 %v286, %v312
    %vm314 = vcmp.eq.f32.partialorder %v286, inf
    %v315 = vsel %vm314, %v286, %v313
    %vm316 = vcmp.eq.f32.partialorder %v286, 0.0
    %v317 = vand.u32 %v286, 2147483648
    %v318 = vsel %vm316, %v317, %v315
    %v319 = vrsqrt.pop %v287
    %v320 = vmul.f32 %v287, %v319
    %vm321 = vcmp.eq.f32.partialorder %v287, inf
    %v322 = vsel %vm321, %v287, %v320
    %vm323 = vcmp.eq.f32.partialorder %v287, 0.0
    %v324 = vand.u32 %v287, 2147483648
    %v325 = vsel %vm323, %v324, %v322
    %v326 = vrsqrt.pop %v288
    %v327 = vmul.f32 %v288, %v326
    %vm328 = vcmp.eq.f32.partialorder %v288, inf
    %v329 = vsel %vm328, %v288, %v327
    %vm330 = vcmp.eq.f32.partialorder %v288, 0.0
    %v331 = vand.u32 %v288, 2147483648
    %v332 = vsel %vm330, %v331, %v329
    %v333 = vrsqrt.pop %v289
    %v334 = vmul.f32 %v289, %v333
    %vm335 = vcmp.eq.f32.partialorder %v289, inf
    %v336 = vsel %vm335, %v289, %v334
    %vm337 = vcmp.eq.f32.partialorder %v289, 0.0
    %v338 = vand.u32 %v289, 2147483648
    %v339 = vsel %vm337, %v338, %v336
    %v340 = vrsqrt.pop %v290
    %v341 = vmul.f32 %v290, %v340
    %vm342 = vcmp.eq.f32.partialorder %v290, inf
    %v343 = vsel %vm342, %v290, %v341
    %vm344 = vcmp.eq.f32.partialorder %v290, 0.0
    %v345 = vand.u32 %v290, 2147483648
    %v346 = vsel %vm344, %v345, %v343
    %v347 = vmul.f32 %v259, 6.2831855
    %v348 = vmul.f32 %v260, 6.2831855
    %v349 = vmul.f32 %v261, 6.2831855
    %v350 = vmul.f32 %v262, 6.2831855
    %v351 = vmul.f32 %v263, 6.2831855
    %v352 = vmul.f32 %v264, 6.2831855
    %v353 = vmul.f32 %v265, 6.2831855
    %v354 = vmul.f32 %v266, 6.2831855
    %v355 = vand.u32 2147483647, %v347
    %vm356 = vcmp.le.f32.partialorder %v355, 0.7853982
    %vm357 = vcmp.lt.s32.totalorder %v347, 0
    %v358 = vand.u32 %v347, 2139095040
    %v359 = vshrl.u32 %v358, 23
    %v360 = vsub.s32 %v359, 127
    %v361 = vand.u32 2147483647, %v347
    %v362 = vand.u32 %v361, 8388607
    %v363 = vor.u32 %v362, 8388608
    %v364 = vsub.s32 0, %v363
    %v365 = vadd.s32 %v360, 1
    %vm366 = vcmp.gt.s32.totalorder %v365, 0
    %v367 = vsel %vm366, %v365, 0
    %v368 = vshrl.u32 %v367, 5
    %v369 = vand.u32 %v367, 31
    %v370 = vsub.s32 32, %v369
    %v371 = vshrl.u32 683565275, %v370
    %v372 = vshll.u32 683565275, %v369
    %v373 = vshrl.u32 2475754826, %v370
    %v374 = vor.u32 %v372, %v373
    %v375 = vshll.u32 2475754826, %v369
    %v376 = vshrl.u32 2131351028, %v370
    %v377 = vor.u32 %v375, %v376
    %v378 = vshll.u32 2131351028, %v369
    %v379 = vshrl.u32 2102212464, %v370
    %v380 = vor.u32 %v378, %v379
    %v381 = vshll.u32 2102212464, %v369
    %v382 = vshrl.u32 920167782, %v370
    %v383 = vor.u32 %v381, %v382
    %v384 = vshll.u32 920167782, %v369
    %v385 = vshrl.u32 1326507024, %v370
    %v386 = vor.u32 %v384, %v385
    %vm387 = vcmp.lt.s32.totalorder %v368, 1
    %vm388 = vcmp.lt.s32.totalorder %v368, 2
    %vm389 = vcmp.lt.s32.totalorder %v368, 3
    %vm390 = vcmp.lt.s32.totalorder %v368, 4
    %v391 = vsel %vm387, %v371, %v374
    %v392 = vsel %vm390, %v380, 2102212464
    %v393 = vsel %vm389, %v377, %v392
    %v394 = vsel %vm388, %v391, %v393
    %v395 = vsel %vm387, %v374, %v377
    %v396 = vsel %vm390, %v383, 920167782
    %v397 = vsel %vm389, %v380, %v396
    %v398 = vsel %vm388, %v395, %v397
    %v399 = vsel %vm387, %v377, %v380
    %v400 = vsel %vm390, %v386, 1326507024
    %v401 = vsel %vm389, %v383, %v400
    %v402 = vsel %vm388, %v399, %v401
    %v403 = vshll.u32 %v363, 8
    %v404 = vmul.u32.u64.compose %v403, %v402
    %v405 = vextract.low.u32 %v404
    %v406 = vextract.high.u32 %v404
    %v407 = vmul.u32.u64.compose %v403, %v398
    %v408 = vextract.low.u32 %v407
    %v409 = vextract.high.u32 %v407
    %v410 = vmul.u32 %v403, %v394
    %v411 = vadd.s32 %v406, %v408
    %vm412 = vc.u32 %v406, %v408
    %v413 = vadd.s32 %v409, 1
    %v414 = vsel %vm412, %v413, %v409
    %v415 = vadd.s32 %v410, %v414
    %v416 = vadd.s32 %v415, 536870912
    %v417 = vshrl.u32 %v416, 30
    %v418 = vshll.u32 %v417, 30
    %v419 = vsub.s32 %v415, %v418
    %vm420 = vcmp.lt.s32.totalorder %v419, 0
    %v421 = vsub.s32 0, %v419
    %v422 = vsel %vm420, %v421, %v419
    %v423 = vclz %v422
    %v424 = vsub.s32 %v423, 2
    %vm425 = vcmp.gt.s32.totalorder 0, %v424
    %v426 = vsel %vm425, 0, %v424
    %v427 = vsub.s32 32, %v426
    %v428 = vshll.u32 %v419, %v426
    %v429 = vshrl.u32 %v411, %v427
    %v430 = vor.u32 %v428, %v429
    %v431 = vsub.s32 4294967266, %v426
    %v432 = vadd.s32 %v431, 127
    %v433 = vshll.u32 %v432, 23
    %v434 = vor.u32 4788187, %v433
    %v435 = vand.u32 2147483647, %v434
    %v437 = vcvt.s32.f32 %v430
    %v438 = vmul.f32 %v437, %v435
    %v439 = vxor.u32 %v438, 2147483648
    %v440 = vsel %vm357, %v439, %v438
    %v441 = vsub.s32 4, %v417
    %v442 = vsel %vm357, %v441, %v417
    %v443 = vsel %vm356, %v347, %v440
    %v444 = vsel %vm356, 0, %v442
    %v445 = vcosq.f32.pop %v443
    %v446 = vsinq.f32.pop %v443
    %vm447 = vweird.f32 %v347
    %v448 = vand.u32 %v444, 3
    %vm449 = vcmp.lt.s32.totalorder %v448, 2
    %vm450 = vcmp.eq.s32.totalorder %v448, 0
    %v451 = vxor.u32 %v446, 2147483648
    %v452 = vsel %vm450, %v445, %v451
    %vm453 = vcmp.eq.s32.totalorder %v448, 2
    %v454 = vxor.u32 %v445, 2147483648
    %v455 = vsel %vm453, %v454, %v446
    %v456 = vsel %vm449, %v452, %v455
    %v457 = vsel %vm447, nan, %v456
    %v458 = vand.u32 2147483647, %v348
    %vm459 = vcmp.le.f32.partialorder %v458, 0.7853982
    %vm460 = vcmp.lt.s32.totalorder %v348, 0
    %v461 = vand.u32 %v348, 2139095040
    %v462 = vshrl.u32 %v461, 23
    %v463 = vsub.s32 %v462, 127
    %v464 = vand.u32 2147483647, %v348
    %v465 = vand.u32 %v464, 8388607
    %v466 = vor.u32 %v465, 8388608
    %v467 = vsub.s32 0, %v466
    %v468 = vadd.s32 %v463, 1
    %vm469 = vcmp.gt.s32.totalorder %v468, 0
    %v470 = vsel %vm469, %v468, 0
    %v471 = vshrl.u32 %v470, 5
    %v472 = vand.u32 %v470, 31
    %v473 = vsub.s32 32, %v472
    %v474 = vshrl.u32 683565275, %v473
    %v475 = vshll.u32 683565275, %v472
    %v476 = vshrl.u32 2475754826, %v473
    %v477 = vor.u32 %v475, %v476
    %v478 = vshll.u32 2475754826, %v472
    %v479 = vshrl.u32 2131351028, %v473
    %v480 = vor.u32 %v478, %v479
    %v481 = vshll.u32 2131351028, %v472
    %v482 = vshrl.u32 2102212464, %v473
    %v483 = vor.u32 %v481, %v482
    %v484 = vshll.u32 2102212464, %v472
    %v485 = vshrl.u32 920167782, %v473
    %v486 = vor.u32 %v484, %v485
    %v487 = vshll.u32 920167782, %v472
    %v488 = vshrl.u32 1326507024, %v473
    %v489 = vor.u32 %v487, %v488
    %vm490 = vcmp.lt.s32.totalorder %v471, 1
    %vm491 = vcmp.lt.s32.totalorder %v471, 2
    %vm492 = vcmp.lt.s32.totalorder %v471, 3
    %vm493 = vcmp.lt.s32.totalorder %v471, 4
    %v494 = vsel %vm490, %v474, %v477
    %v495 = vsel %vm493, %v483, 2102212464
    %v496 = vsel %vm492, %v480, %v495
    %v497 = vsel %vm491, %v494, %v496
    %v498 = vsel %vm490, %v477, %v480
    %v499 = vsel %vm493, %v486, 920167782
    %v500 = vsel %vm492, %v483, %v499
    %v501 = vsel %vm491, %v498, %v500
    %v502 = vsel %vm490, %v480, %v483
    %v503 = vsel %vm493, %v489, 1326507024
    %v504 = vsel %vm492, %v486, %v503
    %v505 = vsel %vm491, %v502, %v504
    %v506 = vshll.u32 %v466, 8
    %v507 = vmul.u32.u64.compose %v506, %v505
    %v508 = vextract.low.u32 %v507
    %v509 = vextract.high.u32 %v507
    %v510 = vmul.u32.u64.compose %v506, %v501
    %v511 = vextract.low.u32 %v510
    %v512 = vextract.high.u32 %v510
    %v513 = vmul.u32 %v506, %v497
    %v514 = vadd.s32 %v509, %v511
    %vm515 = vc.u32 %v509, %v511
    %v516 = vadd.s32 %v512, 1
    %v517 = vsel %vm515, %v516, %v512
    %v518 = vadd.s32 %v513, %v517
    %v519 = vadd.s32 %v518, 536870912
    %v520 = vshrl.u32 %v519, 30
    %v521 = vshll.u32 %v520, 30
    %v522 = vsub.s32 %v518, %v521
    %vm523 = vcmp.lt.s32.totalorder %v522, 0
    %v524 = vsub.s32 0, %v522
    %v525 = vsel %vm523, %v524, %v522
    %v526 = vclz %v525
    %v527 = vsub.s32 %v526, 2
    %vm528 = vcmp.gt.s32.totalorder 0, %v527
    %v529 = vsel %vm528, 0, %v527
    %v530 = vsub.s32 32, %v529
    %v531 = vshll.u32 %v522, %v529
    %v532 = vshrl.u32 %v514, %v530
    %v533 = vor.u32 %v531, %v532
    %v534 = vsub.s32 4294967266, %v529
    %v535 = vadd.s32 %v534, 127
    %v536 = vshll.u32 %v535, 23
    %v537 = vor.u32 4788187, %v536
    %v538 = vand.u32 2147483647, %v537
    %v540 = vcvt.s32.f32 %v533
    %v541 = vmul.f32 %v540, %v538
    %v542 = vxor.u32 %v541, 2147483648
    %v543 = vsel %vm460, %v542, %v541
    %v544 = vsub.s32 4, %v520
    %v545 = vsel %vm460, %v544, %v520
    %v546 = vsel %vm459, %v348, %v543
    %v547 = vsel %vm459, 0, %v545
    %v548 = vcosq.f32.pop %v546
    %v549 = vsinq.f32.pop %v546
    %vm550 = vweird.f32 %v348
    %v551 = vand.u32 %v547, 3
    %vm552 = vcmp.lt.s32.totalorder %v551, 2
    %vm553 = vcmp.eq.s32.totalorder %v551, 0
    %v554 = vxor.u32 %v549, 2147483648
    %v555 = vsel %vm553, %v548, %v554
    %vm556 = vcmp.eq.s32.totalorder %v551, 2
    %v557 = vxor.u32 %v548, 2147483648
    %v558 = vsel %vm556, %v557, %v549
    %v559 = vsel %vm552, %v555, %v558
    %v560 = vsel %vm550, nan, %v559
    %v561 = vand.u32 2147483647, %v349
    %vm562 = vcmp.le.f32.partialorder %v561, 0.7853982
    %vm563 = vcmp.lt.s32.totalorder %v349, 0
    %v564 = vand.u32 %v349, 2139095040
    %v565 = vshrl.u32 %v564, 23
    %v566 = vsub.s32 %v565, 127
    %v567 = vand.u32 2147483647, %v349
    %v568 = vand.u32 %v567, 8388607
    %v569 = vor.u32 %v568, 8388608
    %v570 = vsub.s32 0, %v569
    %v571 = vadd.s32 %v566, 1
    %vm572 = vcmp.gt.s32.totalorder %v571, 0
    %v573 = vsel %vm572, %v571, 0
    %v574 = vshrl.u32 %v573, 5
    %v575 = vand.u32 %v573, 31
    %v576 = vsub.s32 32, %v575
    %v577 = vshrl.u32 683565275, %v576
    %v578 = vshll.u32 683565275, %v575
    %v579 = vshrl.u32 2475754826, %v576
    %v580 = vor.u32 %v578, %v579
    %v581 = vshll.u32 2475754826, %v575
    %v582 = vshrl.u32 2131351028, %v576
    %v583 = vor.u32 %v581, %v582
    %v584 = vshll.u32 2131351028, %v575
    %v585 = vshrl.u32 2102212464, %v576
    %v586 = vor.u32 %v584, %v585
    %v587 = vshll.u32 2102212464, %v575
    %v588 = vshrl.u32 920167782, %v576
    %v589 = vor.u32 %v587, %v588
    %v590 = vshll.u32 920167782, %v575
    %v591 = vshrl.u32 1326507024, %v576
    %v592 = vor.u32 %v590, %v591
    %vm593 = vcmp.lt.s32.totalorder %v574, 1
    %vm594 = vcmp.lt.s32.totalorder %v574, 2
    %vm595 = vcmp.lt.s32.totalorder %v574, 3
    %vm596 = vcmp.lt.s32.totalorder %v574, 4
    %v597 = vsel %vm593, %v577, %v580
    %v598 = vsel %vm596, %v586, 2102212464
    %v599 = vsel %vm595, %v583, %v598
    %v600 = vsel %vm594, %v597, %v599
    %v601 = vsel %vm593, %v580, %v583
    %v602 = vsel %vm596, %v589, 920167782
    %v603 = vsel %vm595, %v586, %v602
    %v604 = vsel %vm594, %v601, %v603
    %v605 = vsel %vm593, %v583, %v586
    %v606 = vsel %vm596, %v592, 1326507024
    %v607 = vsel %vm595, %v589, %v606
    %v608 = vsel %vm594, %v605, %v607
    %v609 = vshll.u32 %v569, 8
    %v610 = vmul.u32.u64.compose %v609, %v608
    %v611 = vextract.low.u32 %v610
    %v612 = vextract.high.u32 %v610
    %v613 = vmul.u32.u64.compose %v609, %v604
    %v614 = vextract.low.u32 %v613
    %v615 = vextract.high.u32 %v613
    %v616 = vmul.u32 %v609, %v600
    %v617 = vadd.s32 %v612, %v614
    %vm618 = vc.u32 %v612, %v614
    %v619 = vadd.s32 %v615, 1
    %v620 = vsel %vm618, %v619, %v615
    %v621 = vadd.s32 %v616, %v620
    %v622 = vadd.s32 %v621, 536870912
    %v623 = vshrl.u32 %v622, 30
    %v624 = vshll.u32 %v623, 30
    %v625 = vsub.s32 %v621, %v624
    %vm626 = vcmp.lt.s32.totalorder %v625, 0
    %v627 = vsub.s32 0, %v625
    %v628 = vsel %vm626, %v627, %v625
    %v629 = vclz %v628
    %v630 = vsub.s32 %v629, 2
    %vm631 = vcmp.gt.s32.totalorder 0, %v630
    %v632 = vsel %vm631, 0, %v630
    %v633 = vsub.s32 32, %v632
    %v634 = vshll.u32 %v625, %v632
    %v635 = vshrl.u32 %v617, %v633
    %v636 = vor.u32 %v634, %v635
    %v637 = vsub.s32 4294967266, %v632
    %v638 = vadd.s32 %v637, 127
    %v639 = vshll.u32 %v638, 23
    %v640 = vor.u32 4788187, %v639
    %v641 = vand.u32 2147483647, %v640
    %v643 = vcvt.s32.f32 %v636
    %v644 = vmul.f32 %v643, %v641
    %v645 = vxor.u32 %v644, 2147483648
    %v646 = vsel %vm563, %v645, %v644
    %v647 = vsub.s32 4, %v623
    %v648 = vsel %vm563, %v647, %v623
    %v649 = vsel %vm562, %v349, %v646
    %v650 = vsel %vm562, 0, %v648
    %v651 = vcosq.f32.pop %v649
    %v652 = vsinq.f32.pop %v649
    %vm653 = vweird.f32 %v349
    %v654 = vand.u32 %v650, 3
    %vm655 = vcmp.lt.s32.totalorder %v654, 2
    %vm656 = vcmp.eq.s32.totalorder %v654, 0
    %v657 = vxor.u32 %v652, 2147483648
    %v658 = vsel %vm656, %v651, %v657
    %vm659 = vcmp.eq.s32.totalorder %v654, 2
    %v660 = vxor.u32 %v651, 2147483648
    %v661 = vsel %vm659, %v660, %v652
    %v662 = vsel %vm655, %v658, %v661
    %v663 = vsel %vm653, nan, %v662
    %v664 = vand.u32 2147483647, %v350
    %vm665 = vcmp.le.f32.partialorder %v664, 0.7853982
    %vm666 = vcmp.lt.s32.totalorder %v350, 0
    %v667 = vand.u32 %v350, 2139095040
    %v668 = vshrl.u32 %v667, 23
    %v669 = vsub.s32 %v668, 127
    %v670 = vand.u32 2147483647, %v350
    %v671 = vand.u32 %v670, 8388607
    %v672 = vor.u32 %v671, 8388608
    %v673 = vsub.s32 0, %v672
    %v674 = vadd.s32 %v669, 1
    %vm675 = vcmp.gt.s32.totalorder %v674, 0
    %v676 = vsel %vm675, %v674, 0
    %v677 = vshrl.u32 %v676, 5
    %v678 = vand.u32 %v676, 31
    %v679 = vsub.s32 32, %v678
    %v680 = vshrl.u32 683565275, %v679
    %v681 = vshll.u32 683565275, %v678
    %v682 = vshrl.u32 2475754826, %v679
    %v683 = vor.u32 %v681, %v682
    %v684 = vshll.u32 2475754826, %v678
    %v685 = vshrl.u32 2131351028, %v679
    %v686 = vor.u32 %v684, %v685
    %v687 = vshll.u32 2131351028, %v678
    %v688 = vshrl.u32 2102212464, %v679
    %v689 = vor.u32 %v687, %v688
    %v690 = vshll.u32 2102212464, %v678
    %v691 = vshrl.u32 920167782, %v679
    %v692 = vor.u32 %v690, %v691
    %v693 = vshll.u32 920167782, %v678
    %v694 = vshrl.u32 1326507024, %v679
    %v695 = vor.u32 %v693, %v694
    %vm696 = vcmp.lt.s32.totalorder %v677, 1
    %vm697 = vcmp.lt.s32.totalorder %v677, 2
    %vm698 = vcmp.lt.s32.totalorder %v677, 3
    %vm699 = vcmp.lt.s32.totalorder %v677, 4
    %v700 = vsel %vm696, %v680, %v683
    %v701 = vsel %vm699, %v689, 2102212464
    %v702 = vsel %vm698, %v686, %v701
    %v703 = vsel %vm697, %v700, %v702
    %v704 = vsel %vm696, %v683, %v686
    %v705 = vsel %vm699, %v692, 920167782
    %v706 = vsel %vm698, %v689, %v705
    %v707 = vsel %vm697, %v704, %v706
    %v708 = vsel %vm696, %v686, %v689
    %v709 = vsel %vm699, %v695, 1326507024
    %v710 = vsel %vm698, %v692, %v709
    %v711 = vsel %vm697, %v708, %v710
    %v712 = vshll.u32 %v672, 8
    %v713 = vmul.u32.u64.compose %v712, %v711
    %v714 = vextract.low.u32 %v713
    %v715 = vextract.high.u32 %v713
    %v716 = vmul.u32.u64.compose %v712, %v707
    %v717 = vextract.low.u32 %v716
    %v718 = vextract.high.u32 %v716
    %v719 = vmul.u32 %v712, %v703
    %v720 = vadd.s32 %v715, %v717
    %vm721 = vc.u32 %v715, %v717
    %v722 = vadd.s32 %v718, 1
    %v723 = vsel %vm721, %v722, %v718
    %v724 = vadd.s32 %v719, %v723
    %v725 = vadd.s32 %v724, 536870912
    %v726 = vshrl.u32 %v725, 30
    %v727 = vshll.u32 %v726, 30
    %v728 = vsub.s32 %v724, %v727
    %vm729 = vcmp.lt.s32.totalorder %v728, 0
    %v730 = vsub.s32 0, %v728
    %v731 = vsel %vm729, %v730, %v728
    %v732 = vclz %v731
    %v733 = vsub.s32 %v732, 2
    %vm734 = vcmp.gt.s32.totalorder 0, %v733
    %v735 = vsel %vm734, 0, %v733
    %v736 = vsub.s32 32, %v735
    %v737 = vshll.u32 %v728, %v735
    %v738 = vshrl.u32 %v720, %v736
    %v739 = vor.u32 %v737, %v738
    %v740 = vsub.s32 4294967266, %v735
    %v741 = vadd.s32 %v740, 127
    %v742 = vshll.u32 %v741, 23
    %v743 = vor.u32 4788187, %v742
    %v744 = vand.u32 2147483647, %v743
    %v746 = vcvt.s32.f32 %v739
    %v747 = vmul.f32 %v746, %v744
    %v748 = vxor.u32 %v747, 2147483648
    %v749 = vsel %vm666, %v748, %v747
    %v750 = vsub.s32 4, %v726
    %v751 = vsel %vm666, %v750, %v726
    %v752 = vsel %vm665, %v350, %v749
    %v753 = vsel %vm665, 0, %v751
    %v754 = vcosq.f32.pop %v752
    %v755 = vsinq.f32.pop %v752
    %vm756 = vweird.f32 %v350
    %v757 = vand.u32 %v753, 3
    %vm758 = vcmp.lt.s32.totalorder %v757, 2
    %vm759 = vcmp.eq.s32.totalorder %v757, 0
    %v760 = vxor.u32 %v755, 2147483648
    %v761 = vsel %vm759, %v754, %v760
    %vm762 = vcmp.eq.s32.totalorder %v757, 2
    %v763 = vxor.u32 %v754, 2147483648
    %v764 = vsel %vm762, %v763, %v755
    %v765 = vsel %vm758, %v761, %v764
    %v766 = vsel %vm756, nan, %v765
    %v767 = vand.u32 2147483647, %v351
    %vm768 = vcmp.le.f32.partialorder %v767, 0.7853982
    %vm769 = vcmp.lt.s32.totalorder %v351, 0
    %v770 = vand.u32 %v351, 2139095040
    %v771 = vshrl.u32 %v770, 23
    %v772 = vsub.s32 %v771, 127
    %v773 = vand.u32 2147483647, %v351
    %v774 = vand.u32 %v773, 8388607
    %v775 = vor.u32 %v774, 8388608
    %v776 = vsub.s32 0, %v775
    %v777 = vadd.s32 %v772, 1
    %vm778 = vcmp.gt.s32.totalorder %v777, 0
    %v779 = vsel %vm778, %v777, 0
    %v780 = vshrl.u32 %v779, 5
    %v781 = vand.u32 %v779, 31
    %v782 = vsub.s32 32, %v781
    %v783 = vshrl.u32 683565275, %v782
    %v784 = vshll.u32 683565275, %v781
    %v785 = vshrl.u32 2475754826, %v782
    %v786 = vor.u32 %v784, %v785
    %v787 = vshll.u32 2475754826, %v781
    %v788 = vshrl.u32 2131351028, %v782
    %v789 = vor.u32 %v787, %v788
    %v790 = vshll.u32 2131351028, %v781
    %v791 = vshrl.u32 2102212464, %v782
    %v792 = vor.u32 %v790, %v791
    %v793 = vshll.u32 2102212464, %v781
    %v794 = vshrl.u32 920167782, %v782
    %v795 = vor.u32 %v793, %v794
    %v796 = vshll.u32 920167782, %v781
    %v797 = vshrl.u32 1326507024, %v782
    %v798 = vor.u32 %v796, %v797
    %vm799 = vcmp.lt.s32.totalorder %v780, 1
    %vm800 = vcmp.lt.s32.totalorder %v780, 2
    %vm801 = vcmp.lt.s32.totalorder %v780, 3
    %vm802 = vcmp.lt.s32.totalorder %v780, 4
    %v803 = vsel %vm799, %v783, %v786
    %v804 = vsel %vm802, %v792, 2102212464
    %v805 = vsel %vm801, %v789, %v804
    %v806 = vsel %vm800, %v803, %v805
    %v807 = vsel %vm799, %v786, %v789
    %v808 = vsel %vm802, %v795, 920167782
    %v809 = vsel %vm801, %v792, %v808
    %v810 = vsel %vm800, %v807, %v809
    %v811 = vsel %vm799, %v789, %v792
    %v812 = vsel %vm802, %v798, 1326507024
    %v813 = vsel %vm801, %v795, %v812
    %v814 = vsel %vm800, %v811, %v813
    %v815 = vshll.u32 %v775, 8
    %v816 = vmul.u32.u64.compose %v815, %v814
    %v817 = vextract.low.u32 %v816
    %v818 = vextract.high.u32 %v816
    %v819 = vmul.u32.u64.compose %v815, %v810
    %v820 = vextract.low.u32 %v819
    %v821 = vextract.high.u32 %v819
    %v822 = vmul.u32 %v815, %v806
    %v823 = vadd.s32 %v818, %v820
    %vm824 = vc.u32 %v818, %v820
    %v825 = vadd.s32 %v821, 1
    %v826 = vsel %vm824, %v825, %v821
    %v827 = vadd.s32 %v822, %v826
    %v828 = vadd.s32 %v827, 536870912
    %v829 = vshrl.u32 %v828, 30
    %v830 = vshll.u32 %v829, 30
    %v831 = vsub.s32 %v827, %v830
    %vm832 = vcmp.lt.s32.totalorder %v831, 0
    %v833 = vsub.s32 0, %v831
    %v834 = vsel %vm832, %v833, %v831
    %v835 = vclz %v834
    %v836 = vsub.s32 %v835, 2
    %vm837 = vcmp.gt.s32.totalorder 0, %v836
    %v838 = vsel %vm837, 0, %v836
    %v839 = vsub.s32 32, %v838
    %v840 = vshll.u32 %v831, %v838
    %v841 = vshrl.u32 %v823, %v839
    %v842 = vor.u32 %v840, %v841
    %v843 = vsub.s32 4294967266, %v838
    %v844 = vadd.s32 %v843, 127
    %v845 = vshll.u32 %v844, 23
    %v846 = vor.u32 4788187, %v845
    %v847 = vand.u32 2147483647, %v846
    %v849 = vcvt.s32.f32 %v842
    %v850 = vmul.f32 %v849, %v847
    %v851 = vxor.u32 %v850, 2147483648
    %v852 = vsel %vm769, %v851, %v850
    %v853 = vsub.s32 4, %v829
    %v854 = vsel %vm769, %v853, %v829
    %v855 = vsel %vm768, %v351, %v852
    %v856 = vsel %vm768, 0, %v854
    %v857 = vcosq.f32.pop %v855
    %v858 = vsinq.f32.pop %v855
    %vm859 = vweird.f32 %v351
    %v860 = vand.u32 %v856, 3
    %vm861 = vcmp.lt.s32.totalorder %v860, 2
    %vm862 = vcmp.eq.s32.totalorder %v860, 0
    %v863 = vxor.u32 %v858, 2147483648
    %v864 = vsel %vm862, %v857, %v863
    %vm865 = vcmp.eq.s32.totalorder %v860, 2
    %v866 = vxor.u32 %v857, 2147483648
    %v867 = vsel %vm865, %v866, %v858
    %v868 = vsel %vm861, %v864, %v867
    %v869 = vsel %vm859, nan, %v868
    %v870 = vand.u32 2147483647, %v352
    %vm871 = vcmp.le.f32.partialorder %v870, 0.7853982
    %vm872 = vcmp.lt.s32.totalorder %v352, 0
    %v873 = vand.u32 %v352, 2139095040
    %v874 = vshrl.u32 %v873, 23
    %v875 = vsub.s32 %v874, 127
    %v876 = vand.u32 2147483647, %v352
    %v877 = vand.u32 %v876, 8388607
    %v878 = vor.u32 %v877, 8388608
    %v879 = vsub.s32 0, %v878
    %v880 = vadd.s32 %v875, 1
    %vm881 = vcmp.gt.s32.totalorder %v880, 0
    %v882 = vsel %vm881, %v880, 0
    %v883 = vshrl.u32 %v882, 5
    %v884 = vand.u32 %v882, 31
    %v885 = vsub.s32 32, %v884
    %v886 = vshrl.u32 683565275, %v885
    %v887 = vshll.u32 683565275, %v884
    %v888 = vshrl.u32 2475754826, %v885
    %v889 = vor.u32 %v887, %v888
    %v890 = vshll.u32 2475754826, %v884
    %v891 = vshrl.u32 2131351028, %v885
    %v892 = vor.u32 %v890, %v891
    %v893 = vshll.u32 2131351028, %v884
    %v894 = vshrl.u32 2102212464, %v885
    %v895 = vor.u32 %v893, %v894
    %v896 = vshll.u32 2102212464, %v884
    %v897 = vshrl.u32 920167782, %v885
    %v898 = vor.u32 %v896, %v897
    %v899 = vshll.u32 920167782, %v884
    %v900 = vshrl.u32 1326507024, %v885
    %v901 = vor.u32 %v899, %v900
    %vm902 = vcmp.lt.s32.totalorder %v883, 1
    %vm903 = vcmp.lt.s32.totalorder %v883, 2
    %vm904 = vcmp.lt.s32.totalorder %v883, 3
    %vm905 = vcmp.lt.s32.totalorder %v883, 4
    %v906 = vsel %vm902, %v886, %v889
    %v907 = vsel %vm905, %v895, 2102212464
    %v908 = vsel %vm904, %v892, %v907
    %v909 = vsel %vm903, %v906, %v908
    %v910 = vsel %vm902, %v889, %v892
    %v911 = vsel %vm905, %v898, 920167782
    %v912 = vsel %vm904, %v895, %v911
    %v913 = vsel %vm903, %v910, %v912
    %v914 = vsel %vm902, %v892, %v895
    %v915 = vsel %vm905, %v901, 1326507024
    %v916 = vsel %vm904, %v898, %v915
    %v917 = vsel %vm903, %v914, %v916
    %v918 = vshll.u32 %v878, 8
    %v919 = vmul.u32.u64.compose %v918, %v917
    %v920 = vextract.low.u32 %v919
    %v921 = vextract.high.u32 %v919
    %v922 = vmul.u32.u64.compose %v918, %v913
    %v923 = vextract.low.u32 %v922
    %v924 = vextract.high.u32 %v922
    %v925 = vmul.u32 %v918, %v909
    %v926 = vadd.s32 %v921, %v923
    %vm927 = vc.u32 %v921, %v923
    %v928 = vadd.s32 %v924, 1
    %v929 = vsel %vm927, %v928, %v924
    %v930 = vadd.s32 %v925, %v929
    %v931 = vadd.s32 %v930, 536870912
    %v932 = vshrl.u32 %v931, 30
    %v933 = vshll.u32 %v932, 30
    %v934 = vsub.s32 %v930, %v933
    %vm935 = vcmp.lt.s32.totalorder %v934, 0
    %v936 = vsub.s32 0, %v934
    %v937 = vsel %vm935, %v936, %v934
    %v938 = vclz %v937
    %v939 = vsub.s32 %v938, 2
    %vm940 = vcmp.gt.s32.totalorder 0, %v939
    %v941 = vsel %vm940, 0, %v939
    %v942 = vsub.s32 32, %v941
    %v943 = vshll.u32 %v934, %v941
    %v944 = vshrl.u32 %v926, %v942
    %v945 = vor.u32 %v943, %v944
    %v946 = vsub.s32 4294967266, %v941
    %v947 = vadd.s32 %v946, 127
    %v948 = vshll.u32 %v947, 23
    %v949 = vor.u32 4788187, %v948
    %v950 = vand.u32 2147483647, %v949
    %v952 = vcvt.s32.f32 %v945
    %v953 = vmul.f32 %v952, %v950
    %v954 = vxor.u32 %v953, 2147483648
    %v955 = vsel %vm872, %v954, %v953
    %v956 = vsub.s32 4, %v932
    %v957 = vsel %vm872, %v956, %v932
    %v958 = vsel %vm871, %v352, %v955
    %v959 = vsel %vm871, 0, %v957
    %v960 = vcosq.f32.pop %v958
    %v961 = vsinq.f32.pop %v958
    %vm962 = vweird.f32 %v352
    %v963 = vand.u32 %v959, 3
    %vm964 = vcmp.lt.s32.totalorder %v963, 2
    %vm965 = vcmp.eq.s32.totalorder %v963, 0
    %v966 = vxor.u32 %v961, 2147483648
    %v967 = vsel %vm965, %v960, %v966
    %vm968 = vcmp.eq.s32.totalorder %v963, 2
    %v969 = vxor.u32 %v960, 2147483648
    %v970 = vsel %vm968, %v969, %v961
    %v971 = vsel %vm964, %v967, %v970
    %v972 = vsel %vm962, nan, %v971
    %v973 = vand.u32 2147483647, %v353
    %vm974 = vcmp.le.f32.partialorder %v973, 0.7853982
    %vm975 = vcmp.lt.s32.totalorder %v353, 0
    %v976 = vand.u32 %v353, 2139095040
    %v977 = vshrl.u32 %v976, 23
    %v978 = vsub.s32 %v977, 127
    %v979 = vand.u32 2147483647, %v353
    %v980 = vand.u32 %v979, 8388607
    %v981 = vor.u32 %v980, 8388608
    %v982 = vsub.s32 0, %v981
    %v983 = vadd.s32 %v978, 1
    %vm984 = vcmp.gt.s32.totalorder %v983, 0
    %v985 = vsel %vm984, %v983, 0
    %v986 = vshrl.u32 %v985, 5
    %v987 = vand.u32 %v985, 31
    %v988 = vsub.s32 32, %v987
    %v989 = vshrl.u32 683565275, %v988
    %v990 = vshll.u32 683565275, %v987
    %v991 = vshrl.u32 2475754826, %v988
    %v992 = vor.u32 %v990, %v991
    %v993 = vshll.u32 2475754826, %v987
    %v994 = vshrl.u32 2131351028, %v988
    %v995 = vor.u32 %v993, %v994
    %v996 = vshll.u32 2131351028, %v987
    %v997 = vshrl.u32 2102212464, %v988
    %v998 = vor.u32 %v996, %v997
    %v999 = vshll.u32 2102212464, %v987
    %v1000 = vshrl.u32 920167782, %v988
    %v1001 = vor.u32 %v999, %v1000
    %v1002 = vshll.u32 920167782, %v987
    %v1003 = vshrl.u32 1326507024, %v988
    %v1004 = vor.u32 %v1002, %v1003
    %vm1005 = vcmp.lt.s32.totalorder %v986, 1
    %vm1006 = vcmp.lt.s32.totalorder %v986, 2
    %vm1007 = vcmp.lt.s32.totalorder %v986, 3
    %vm1008 = vcmp.lt.s32.totalorder %v986, 4
    %v1009 = vsel %vm1005, %v989, %v992
    %v1010 = vsel %vm1008, %v998, 2102212464
    %v1011 = vsel %vm1007, %v995, %v1010
    %v1012 = vsel %vm1006, %v1009, %v1011
    %v1013 = vsel %vm1005, %v992, %v995
    %v1014 = vsel %vm1008, %v1001, 920167782
    %v1015 = vsel %vm1007, %v998, %v1014
    %v1016 = vsel %vm1006, %v1013, %v1015
    %v1017 = vsel %vm1005, %v995, %v998
    %v1018 = vsel %vm1008, %v1004, 1326507024
    %v1019 = vsel %vm1007, %v1001, %v1018
    %v1020 = vsel %vm1006, %v1017, %v1019
    %v1021 = vshll.u32 %v981, 8
    %v1022 = vmul.u32.u64.compose %v1021, %v1020
    %v1023 = vextract.low.u32 %v1022
    %v1024 = vextract.high.u32 %v1022
    %v1025 = vmul.u32.u64.compose %v1021, %v1016
    %v1026 = vextract.low.u32 %v1025
    %v1027 = vextract.high.u32 %v1025
    %v1028 = vmul.u32 %v1021, %v1012
    %v1029 = vadd.s32 %v1024, %v1026
    %vm1030 = vc.u32 %v1024, %v1026
    %v1031 = vadd.s32 %v1027, 1
    %v1032 = vsel %vm1030, %v1031, %v1027
    %v1033 = vadd.s32 %v1028, %v1032
    %v1034 = vadd.s32 %v1033, 536870912
    %v1035 = vshrl.u32 %v1034, 30
    %v1036 = vshll.u32 %v1035, 30
    %v1037 = vsub.s32 %v1033, %v1036
    %vm1038 = vcmp.lt.s32.totalorder %v1037, 0
    %v1039 = vsub.s32 0, %v1037
    %v1040 = vsel %vm1038, %v1039, %v1037
    %v1041 = vclz %v1040
    %v1042 = vsub.s32 %v1041, 2
    %vm1043 = vcmp.gt.s32.totalorder 0, %v1042
    %v1044 = vsel %vm1043, 0, %v1042
    %v1045 = vsub.s32 32, %v1044
    %v1046 = vshll.u32 %v1037, %v1044
    %v1047 = vshrl.u32 %v1029, %v1045
    %v1048 = vor.u32 %v1046, %v1047
    %v1049 = vsub.s32 4294967266, %v1044
    %v1050 = vadd.s32 %v1049, 127
    %v1051 = vshll.u32 %v1050, 23
    %v1052 = vor.u32 4788187, %v1051
    %v1053 = vand.u32 2147483647, %v1052
    %v1055 = vcvt.s32.f32 %v1048
    %v1056 = vmul.f32 %v1055, %v1053
    %v1057 = vxor.u32 %v1056, 2147483648
    %v1058 = vsel %vm975, %v1057, %v1056
    %v1059 = vsub.s32 4, %v1035
    %v1060 = vsel %vm975, %v1059, %v1035
    %v1061 = vsel %vm974, %v353, %v1058
    %v1062 = vsel %vm974, 0, %v1060
    %v1063 = vcosq.f32.pop %v1061
    %v1064 = vsinq.f32.pop %v1061
    %vm1065 = vweird.f32 %v353
    %v1066 = vand.u32 %v1062, 3
    %vm1067 = vcmp.lt.s32.totalorder %v1066, 2
    %vm1068 = vcmp.eq.s32.totalorder %v1066, 0
    %v1069 = vxor.u32 %v1064, 2147483648
    %v1070 = vsel %vm1068, %v1063, %v1069
    %vm1071 = vcmp.eq.s32.totalorder %v1066, 2
    %v1072 = vxor.u32 %v1063, 2147483648
    %v1073 = vsel %vm1071, %v1072, %v1064
    %v1074 = vsel %vm1067, %v1070, %v1073
    %v1075 = vsel %vm1065, nan, %v1074
    %v1076 = vand.u32 2147483647, %v354
    %vm1077 = vcmp.le.f32.partialorder %v1076, 0.7853982
    %vm1078 = vcmp.lt.s32.totalorder %v354, 0
    %v1079 = vand.u32 %v354, 2139095040
    %v1080 = vshrl.u32 %v1079, 23
    %v1081 = vsub.s32 %v1080, 127
    %v1082 = vand.u32 2147483647, %v354
    %v1083 = vand.u32 %v1082, 8388607
    %v1084 = vor.u32 %v1083, 8388608
    %v1085 = vsub.s32 0, %v1084
    %v1086 = vadd.s32 %v1081, 1
    %vm1087 = vcmp.gt.s32.totalorder %v1086, 0
    %v1088 = vsel %vm1087, %v1086, 0
    %v1089 = vshrl.u32 %v1088, 5
    %v1090 = vand.u32 %v1088, 31
    %v1091 = vsub.s32 32, %v1090
    %v1092 = vshrl.u32 683565275, %v1091
    %v1093 = vshll.u32 683565275, %v1090
    %v1094 = vshrl.u32 2475754826, %v1091
    %v1095 = vor.u32 %v1093, %v1094
    %v1096 = vshll.u32 2475754826, %v1090
    %v1097 = vshrl.u32 2131351028, %v1091
    %v1098 = vor.u32 %v1096, %v1097
    %v1099 = vshll.u32 2131351028, %v1090
    %v1100 = vshrl.u32 2102212464, %v1091
    %v1101 = vor.u32 %v1099, %v1100
    %v1102 = vshll.u32 2102212464, %v1090
    %v1103 = vshrl.u32 920167782, %v1091
    %v1104 = vor.u32 %v1102, %v1103
    %v1105 = vshll.u32 920167782, %v1090
    %v1106 = vshrl.u32 1326507024, %v1091
    %v1107 = vor.u32 %v1105, %v1106
    %vm1108 = vcmp.lt.s32.totalorder %v1089, 1
    %vm1109 = vcmp.lt.s32.totalorder %v1089, 2
    %vm1110 = vcmp.lt.s32.totalorder %v1089, 3
    %vm1111 = vcmp.lt.s32.totalorder %v1089, 4
    %v1112 = vsel %vm1108, %v1092, %v1095
    %v1113 = vsel %vm1111, %v1101, 2102212464
    %v1114 = vsel %vm1110, %v1098, %v1113
    %v1115 = vsel %vm1109, %v1112, %v1114
    %v1116 = vsel %vm1108, %v1095, %v1098
    %v1117 = vsel %vm1111, %v1104, 920167782
    %v1118 = vsel %vm1110, %v1101, %v1117
    %v1119 = vsel %vm1109, %v1116, %v1118
    %v1120 = vsel %vm1108, %v1098, %v1101
    %v1121 = vsel %vm1111, %v1107, 1326507024
    %v1122 = vsel %vm1110, %v1104, %v1121
    %v1123 = vsel %vm1109, %v1120, %v1122
    %v1124 = vshll.u32 %v1084, 8
    %v1125 = vmul.u32.u64.compose %v1124, %v1123
    %v1126 = vextract.low.u32 %v1125
    %v1127 = vextract.high.u32 %v1125
    %v1128 = vmul.u32.u64.compose %v1124, %v1119
    %v1129 = vextract.low.u32 %v1128
    %v1130 = vextract.high.u32 %v1128
    %v1131 = vmul.u32 %v1124, %v1115
    %v1132 = vadd.s32 %v1127, %v1129
    %vm1133 = vc.u32 %v1127, %v1129
    %v1134 = vadd.s32 %v1130, 1
    %v1135 = vsel %vm1133, %v1134, %v1130
    %v1136 = vadd.s32 %v1131, %v1135
    %v1137 = vadd.s32 %v1136, 536870912
    %v1138 = vshrl.u32 %v1137, 30
    %v1139 = vshll.u32 %v1138, 30
    %v1140 = vsub.s32 %v1136, %v1139
    %vm1141 = vcmp.lt.s32.totalorder %v1140, 0
    %v1142 = vsub.s32 0, %v1140
    %v1143 = vsel %vm1141, %v1142, %v1140
    %v1144 = vclz %v1143
    %v1145 = vsub.s32 %v1144, 2
    %vm1146 = vcmp.gt.s32.totalorder 0, %v1145
    %v1147 = vsel %vm1146, 0, %v1145
    %v1148 = vsub.s32 32, %v1147
    %v1149 = vshll.u32 %v1140, %v1147
    %v1150 = vshrl.u32 %v1132, %v1148
    %v1151 = vor.u32 %v1149, %v1150
    %v1152 = vsub.s32 4294967266, %v1147
    %v1153 = vadd.s32 %v1152, 127
    %v1154 = vshll.u32 %v1153, 23
    %v1155 = vor.u32 4788187, %v1154
    %v1156 = vand.u32 2147483647, %v1155
    %v1158 = vcvt.s32.f32 %v1151
    %v1159 = vmul.f32 %v1158, %v1156
    %v1160 = vxor.u32 %v1159, 2147483648
    %v1161 = vsel %vm1078, %v1160, %v1159
    %v1162 = vsub.s32 4, %v1138
    %v1163 = vsel %vm1078, %v1162, %v1138
    %v1164 = vsel %vm1077, %v354, %v1161
    %v1165 = vsel %vm1077, 0, %v1163
    %v1166 = vcosq.f32.pop %v1164
    %v1167 = vsinq.f32.pop %v1164
    %vm1168 = vweird.f32 %v354
    %v1169 = vand.u32 %v1165, 3
    %vm1170 = vcmp.lt.s32.totalorder %v1169, 2
    %vm1171 = vcmp.eq.s32.totalorder %v1169, 0
    %v1172 = vxor.u32 %v1167, 2147483648
    %v1173 = vsel %vm1171, %v1166, %v1172
    %vm1174 = vcmp.eq.s32.totalorder %v1169, 2
    %v1175 = vxor.u32 %v1166, 2147483648
    %v1176 = vsel %vm1174, %v1175, %v1167
    %v1177 = vsel %vm1170, %v1173, %v1176
    %v1178 = vsel %vm1168, nan, %v1177
    %v1179 = vmul.f32 %v297, %v457
    %v1180 = vmul.f32 %v304, %v560
    %v1181 = vmul.f32 %v311, %v663
    %v1182 = vmul.f32 %v318, %v766
    %v1183 = vmul.f32 %v325, %v869
    %v1184 = vmul.f32 %v332, %v972
    %v1185 = vmul.f32 %v339, %v1075
    %v1186 = vmul.f32 %v346, %v1178
    %v1187 = vand.u32 2147483647, %v347
    %vm1188 = vcmp.le.f32.partialorder %v1187, 0.7853982
    %vm1189 = vcmp.lt.s32.totalorder %v347, 0
    %v1190 = vand.u32 %v347, 2139095040
    %v1191 = vshrl.u32 %v1190, 23
    %v1192 = vsub.s32 %v1191, 127
    %v1193 = vand.u32 2147483647, %v347
    %v1194 = vand.u32 %v1193, 8388607
    %v1195 = vor.u32 %v1194, 8388608
    %v1196 = vsub.s32 0, %v1195
    %v1197 = vadd.s32 %v1192, 1
    %vm1198 = vcmp.gt.s32.totalorder %v1197, 0
    %v1199 = vsel %vm1198, %v1197, 0
    %v1200 = vshrl.u32 %v1199, 5
    %v1201 = vand.u32 %v1199, 31
    %v1202 = vsub.s32 32, %v1201
    %v1203 = vshrl.u32 683565275, %v1202
    %v1204 = vshll.u32 683565275, %v1201
    %v1205 = vshrl.u32 2475754826, %v1202
    %v1206 = vor.u32 %v1204, %v1205
    %v1207 = vshll.u32 2475754826, %v1201
    %v1208 = vshrl.u32 2131351028, %v1202
    %v1209 = vor.u32 %v1207, %v1208
    %v1210 = vshll.u32 2131351028, %v1201
    %v1211 = vshrl.u32 2102212464, %v1202
    %v1212 = vor.u32 %v1210, %v1211
    %v1213 = vshll.u32 2102212464, %v1201
    %v1214 = vshrl.u32 920167782, %v1202
    %v1215 = vor.u32 %v1213, %v1214
    %v1216 = vshll.u32 920167782, %v1201
    %v1217 = vshrl.u32 1326507024, %v1202
    %v1218 = vor.u32 %v1216, %v1217
    %vm1219 = vcmp.lt.s32.totalorder %v1200, 1
    %vm1220 = vcmp.lt.s32.totalorder %v1200, 2
    %vm1221 = vcmp.lt.s32.totalorder %v1200, 3
    %vm1222 = vcmp.lt.s32.totalorder %v1200, 4
    %v1223 = vsel %vm1219, %v1203, %v1206
    %v1224 = vsel %vm1222, %v1212, 2102212464
    %v1225 = vsel %vm1221, %v1209, %v1224
    %v1226 = vsel %vm1220, %v1223, %v1225
    %v1227 = vsel %vm1219, %v1206, %v1209
    %v1228 = vsel %vm1222, %v1215, 920167782
    %v1229 = vsel %vm1221, %v1212, %v1228
    %v1230 = vsel %vm1220, %v1227, %v1229
    %v1231 = vsel %vm1219, %v1209, %v1212
    %v1232 = vsel %vm1222, %v1218, 1326507024
    %v1233 = vsel %vm1221, %v1215, %v1232
    %v1234 = vsel %vm1220, %v1231, %v1233
    %v1235 = vshll.u32 %v1195, 8
    %v1236 = vmul.u32.u64.compose %v1235, %v1234
    %v1237 = vextract.low.u32 %v1236
    %v1238 = vextract.high.u32 %v1236
    %v1239 = vmul.u32.u64.compose %v1235, %v1230
    %v1240 = vextract.low.u32 %v1239
    %v1241 = vextract.high.u32 %v1239
    %v1242 = vmul.u32 %v1235, %v1226
    %v1243 = vadd.s32 %v1238, %v1240
    %vm1244 = vc.u32 %v1238, %v1240
    %v1245 = vadd.s32 %v1241, 1
    %v1246 = vsel %vm1244, %v1245, %v1241
    %v1247 = vadd.s32 %v1242, %v1246
    %v1248 = vadd.s32 %v1247, 536870912
    %v1249 = vshrl.u32 %v1248, 30
    %v1250 = vshll.u32 %v1249, 30
    %v1251 = vsub.s32 %v1247, %v1250
    %vm1252 = vcmp.lt.s32.totalorder %v1251, 0
    %v1253 = vsub.s32 0, %v1251
    %v1254 = vsel %vm1252, %v1253, %v1251
    %v1255 = vclz %v1254
    %v1256 = vsub.s32 %v1255, 2
    %vm1257 = vcmp.gt.s32.totalorder 0, %v1256
    %v1258 = vsel %vm1257, 0, %v1256
    %v1259 = vsub.s32 32, %v1258
    %v1260 = vshll.u32 %v1251, %v1258
    %v1261 = vshrl.u32 %v1243, %v1259
    %v1262 = vor.u32 %v1260, %v1261
    %v1263 = vsub.s32 4294967266, %v1258
    %v1264 = vadd.s32 %v1263, 127
    %v1265 = vshll.u32 %v1264, 23
    %v1266 = vor.u32 4788187, %v1265
    %v1267 = vand.u32 2147483647, %v1266
    %v1269 = vcvt.s32.f32 %v1262
    %v1270 = vmul.f32 %v1269, %v1267
    %v1271 = vxor.u32 %v1270, 2147483648
    %v1272 = vsel %vm1189, %v1271, %v1270
    %v1273 = vsub.s32 4, %v1249
    %v1274 = vsel %vm1189, %v1273, %v1249
    %v1275 = vsel %vm1188, %v347, %v1272
    %v1276 = vsel %vm1188, 0, %v1274
    %v1277 = vcosq.f32.pop %v1275
    %v1278 = vsinq.f32.pop %v1275
    %vm1279 = vweird.f32 %v347
    %v1280 = vadd.s32 %v1276, 3
    %v1281 = vand.u32 %v1280, 3
    %vm1282 = vcmp.lt.s32.totalorder %v1281, 2
    %vm1283 = vcmp.eq.s32.totalorder %v1281, 0
    %v1284 = vxor.u32 %v1278, 2147483648
    %v1285 = vsel %vm1283, %v1277, %v1284
    %vm1286 = vcmp.eq.s32.totalorder %v1281, 2
    %v1287 = vxor.u32 %v1277, 2147483648
    %v1288 = vsel %vm1286, %v1287, %v1278
    %v1289 = vsel %vm1282, %v1285, %v1288
    %v1290 = vsel %vm1279, nan, %v1289
    %v1291 = vand.u32 2147483647, %v348
    %vm1292 = vcmp.le.f32.partialorder %v1291, 0.7853982
    %vm1293 = vcmp.lt.s32.totalorder %v348, 0
    %v1294 = vand.u32 %v348, 2139095040
    %v1295 = vshrl.u32 %v1294, 23
    %v1296 = vsub.s32 %v1295, 127
    %v1297 = vand.u32 2147483647, %v348
    %v1298 = vand.u32 %v1297, 8388607
    %v1299 = vor.u32 %v1298, 8388608
    %v1300 = vsub.s32 0, %v1299
    %v1301 = vadd.s32 %v1296, 1
    %vm1302 = vcmp.gt.s32.totalorder %v1301, 0
    %v1303 = vsel %vm1302, %v1301, 0
    %v1304 = vshrl.u32 %v1303, 5
    %v1305 = vand.u32 %v1303, 31
    %v1306 = vsub.s32 32, %v1305
    %v1307 = vshrl.u32 683565275, %v1306
    %v1308 = vshll.u32 683565275, %v1305
    %v1309 = vshrl.u32 2475754826, %v1306
    %v1310 = vor.u32 %v1308, %v1309
    %v1311 = vshll.u32 2475754826, %v1305
    %v1312 = vshrl.u32 2131351028, %v1306
    %v1313 = vor.u32 %v1311, %v1312
    %v1314 = vshll.u32 2131351028, %v1305
    %v1315 = vshrl.u32 2102212464, %v1306
    %v1316 = vor.u32 %v1314, %v1315
    %v1317 = vshll.u32 2102212464, %v1305
    %v1318 = vshrl.u32 920167782, %v1306
    %v1319 = vor.u32 %v1317, %v1318
    %v1320 = vshll.u32 920167782, %v1305
    %v1321 = vshrl.u32 1326507024, %v1306
    %v1322 = vor.u32 %v1320, %v1321
    %vm1323 = vcmp.lt.s32.totalorder %v1304, 1
    %vm1324 = vcmp.lt.s32.totalorder %v1304, 2
    %vm1325 = vcmp.lt.s32.totalorder %v1304, 3
    %vm1326 = vcmp.lt.s32.totalorder %v1304, 4
    %v1327 = vsel %vm1323, %v1307, %v1310
    %v1328 = vsel %vm1326, %v1316, 2102212464
    %v1329 = vsel %vm1325, %v1313, %v1328
    %v1330 = vsel %vm1324, %v1327, %v1329
    %v1331 = vsel %vm1323, %v1310, %v1313
    %v1332 = vsel %vm1326, %v1319, 920167782
    %v1333 = vsel %vm1325, %v1316, %v1332
    %v1334 = vsel %vm1324, %v1331, %v1333
    %v1335 = vsel %vm1323, %v1313, %v1316
    %v1336 = vsel %vm1326, %v1322, 1326507024
    %v1337 = vsel %vm1325, %v1319, %v1336
    %v1338 = vsel %vm1324, %v1335, %v1337
    %v1339 = vshll.u32 %v1299, 8
    %v1340 = vmul.u32.u64.compose %v1339, %v1338
    %v1341 = vextract.low.u32 %v1340
    %v1342 = vextract.high.u32 %v1340
    %v1343 = vmul.u32.u64.compose %v1339, %v1334
    %v1344 = vextract.low.u32 %v1343
    %v1345 = vextract.high.u32 %v1343
    %v1346 = vmul.u32 %v1339, %v1330
    %v1347 = vadd.s32 %v1342, %v1344
    %vm1348 = vc.u32 %v1342, %v1344
    %v1349 = vadd.s32 %v1345, 1
    %v1350 = vsel %vm1348, %v1349, %v1345
    %v1351 = vadd.s32 %v1346, %v1350
    %v1352 = vadd.s32 %v1351, 536870912
    %v1353 = vshrl.u32 %v1352, 30
    %v1354 = vshll.u32 %v1353, 30
    %v1355 = vsub.s32 %v1351, %v1354
    %vm1356 = vcmp.lt.s32.totalorder %v1355, 0
    %v1357 = vsub.s32 0, %v1355
    %v1358 = vsel %vm1356, %v1357, %v1355
    %v1359 = vclz %v1358
    %v1360 = vsub.s32 %v1359, 2
    %vm1361 = vcmp.gt.s32.totalorder 0, %v1360
    %v1362 = vsel %vm1361, 0, %v1360
    %v1363 = vsub.s32 32, %v1362
    %v1364 = vshll.u32 %v1355, %v1362
    %v1365 = vshrl.u32 %v1347, %v1363
    %v1366 = vor.u32 %v1364, %v1365
    %v1367 = vsub.s32 4294967266, %v1362
    %v1368 = vadd.s32 %v1367, 127
    %v1369 = vshll.u32 %v1368, 23
    %v1370 = vor.u32 4788187, %v1369
    %v1371 = vand.u32 2147483647, %v1370
    %v1373 = vcvt.s32.f32 %v1366
    %v1374 = vmul.f32 %v1373, %v1371
    %v1375 = vxor.u32 %v1374, 2147483648
    %v1376 = vsel %vm1293, %v1375, %v1374
    %v1377 = vsub.s32 4, %v1353
    %v1378 = vsel %vm1293, %v1377, %v1353
    %v1379 = vsel %vm1292, %v348, %v1376
    %v1380 = vsel %vm1292, 0, %v1378
    %v1381 = vcosq.f32.pop %v1379
    %v1382 = vsinq.f32.pop %v1379
    %vm1383 = vweird.f32 %v348
    %v1384 = vadd.s32 %v1380, 3
    %v1385 = vand.u32 %v1384, 3
    %vm1386 = vcmp.lt.s32.totalorder %v1385, 2
    %vm1387 = vcmp.eq.s32.totalorder %v1385, 0
    %v1388 = vxor.u32 %v1382, 2147483648
    %v1389 = vsel %vm1387, %v1381, %v1388
    %vm1390 = vcmp.eq.s32.totalorder %v1385, 2
    %v1391 = vxor.u32 %v1381, 2147483648
    %v1392 = vsel %vm1390, %v1391, %v1382
    %v1393 = vsel %vm1386, %v1389, %v1392
    %v1394 = vsel %vm1383, nan, %v1393
    %v1395 = vand.u32 2147483647, %v349
    %vm1396 = vcmp.le.f32.partialorder %v1395, 0.7853982
    %vm1397 = vcmp.lt.s32.totalorder %v349, 0
    %v1398 = vand.u32 %v349, 2139095040
    %v1399 = vshrl.u32 %v1398, 23
    %v1400 = vsub.s32 %v1399, 127
    %v1401 = vand.u32 2147483647, %v349
    %v1402 = vand.u32 %v1401, 8388607
    %v1403 = vor.u32 %v1402, 8388608
    %v1404 = vsub.s32 0, %v1403
    %v1405 = vadd.s32 %v1400, 1
    %vm1406 = vcmp.gt.s32.totalorder %v1405, 0
    %v1407 = vsel %vm1406, %v1405, 0
    %v1408 = vshrl.u32 %v1407, 5
    %v1409 = vand.u32 %v1407, 31
    %v1410 = vsub.s32 32, %v1409
    %v1411 = vshrl.u32 683565275, %v1410
    %v1412 = vshll.u32 683565275, %v1409
    %v1413 = vshrl.u32 2475754826, %v1410
    %v1414 = vor.u32 %v1412, %v1413
    %v1415 = vshll.u32 2475754826, %v1409
    %v1416 = vshrl.u32 2131351028, %v1410
    %v1417 = vor.u32 %v1415, %v1416
    %v1418 = vshll.u32 2131351028, %v1409
    %v1419 = vshrl.u32 2102212464, %v1410
    %v1420 = vor.u32 %v1418, %v1419
    %v1421 = vshll.u32 2102212464, %v1409
    %v1422 = vshrl.u32 920167782, %v1410
    %v1423 = vor.u32 %v1421, %v1422
    %v1424 = vshll.u32 920167782, %v1409
    %v1425 = vshrl.u32 1326507024, %v1410
    %v1426 = vor.u32 %v1424, %v1425
    %vm1427 = vcmp.lt.s32.totalorder %v1408, 1
    %vm1428 = vcmp.lt.s32.totalorder %v1408, 2
    %vm1429 = vcmp.lt.s32.totalorder %v1408, 3
    %vm1430 = vcmp.lt.s32.totalorder %v1408, 4
    %v1431 = vsel %vm1427, %v1411, %v1414
    %v1432 = vsel %vm1430, %v1420, 2102212464
    %v1433 = vsel %vm1429, %v1417, %v1432
    %v1434 = vsel %vm1428, %v1431, %v1433
    %v1435 = vsel %vm1427, %v1414, %v1417
    %v1436 = vsel %vm1430, %v1423, 920167782
    %v1437 = vsel %vm1429, %v1420, %v1436
    %v1438 = vsel %vm1428, %v1435, %v1437
    %v1439 = vsel %vm1427, %v1417, %v1420
    %v1440 = vsel %vm1430, %v1426, 1326507024
    %v1441 = vsel %vm1429, %v1423, %v1440
    %v1442 = vsel %vm1428, %v1439, %v1441
    %v1443 = vshll.u32 %v1403, 8
    %v1444 = vmul.u32.u64.compose %v1443, %v1442
    %v1445 = vextract.low.u32 %v1444
    %v1446 = vextract.high.u32 %v1444
    %v1447 = vmul.u32.u64.compose %v1443, %v1438
    %v1448 = vextract.low.u32 %v1447
    %v1449 = vextract.high.u32 %v1447
    %v1450 = vmul.u32 %v1443, %v1434
    %v1451 = vadd.s32 %v1446, %v1448
    %vm1452 = vc.u32 %v1446, %v1448
    %v1453 = vadd.s32 %v1449, 1
    %v1454 = vsel %vm1452, %v1453, %v1449
    %v1455 = vadd.s32 %v1450, %v1454
    %v1456 = vadd.s32 %v1455, 536870912
    %v1457 = vshrl.u32 %v1456, 30
    %v1458 = vshll.u32 %v1457, 30
    %v1459 = vsub.s32 %v1455, %v1458
    %vm1460 = vcmp.lt.s32.totalorder %v1459, 0
    %v1461 = vsub.s32 0, %v1459
    %v1462 = vsel %vm1460, %v1461, %v1459
    %v1463 = vclz %v1462
    %v1464 = vsub.s32 %v1463, 2
    %vm1465 = vcmp.gt.s32.totalorder 0, %v1464
    %v1466 = vsel %vm1465, 0, %v1464
    %v1467 = vsub.s32 32, %v1466
    %v1468 = vshll.u32 %v1459, %v1466
    %v1469 = vshrl.u32 %v1451, %v1467
    %v1470 = vor.u32 %v1468, %v1469
    %v1471 = vsub.s32 4294967266, %v1466
    %v1472 = vadd.s32 %v1471, 127
    %v1473 = vshll.u32 %v1472, 23
    %v1474 = vor.u32 4788187, %v1473
    %v1475 = vand.u32 2147483647, %v1474
    %v1477 = vcvt.s32.f32 %v1470
    %v1478 = vmul.f32 %v1477, %v1475
    %v1479 = vxor.u32 %v1478, 2147483648
    %v1480 = vsel %vm1397, %v1479, %v1478
    %v1481 = vsub.s32 4, %v1457
    %v1482 = vsel %vm1397, %v1481, %v1457
    %v1483 = vsel %vm1396, %v349, %v1480
    %v1484 = vsel %vm1396, 0, %v1482
    %v1485 = vcosq.f32.pop %v1483
    %v1486 = vsinq.f32.pop %v1483
    %vm1487 = vweird.f32 %v349
    %v1488 = vadd.s32 %v1484, 3
    %v1489 = vand.u32 %v1488, 3
    %vm1490 = vcmp.lt.s32.totalorder %v1489, 2
    %vm1491 = vcmp.eq.s32.totalorder %v1489, 0
    %v1492 = vxor.u32 %v1486, 2147483648
    %v1493 = vsel %vm1491, %v1485, %v1492
    %vm1494 = vcmp.eq.s32.totalorder %v1489, 2
    %v1495 = vxor.u32 %v1485, 2147483648
    %v1496 = vsel %vm1494, %v1495, %v1486
    %v1497 = vsel %vm1490, %v1493, %v1496
    %v1498 = vsel %vm1487, nan, %v1497
    %v1499 = vand.u32 2147483647, %v350
    %vm1500 = vcmp.le.f32.partialorder %v1499, 0.7853982
    %vm1501 = vcmp.lt.s32.totalorder %v350, 0
    %v1502 = vand.u32 %v350, 2139095040
    %v1503 = vshrl.u32 %v1502, 23
    %v1504 = vsub.s32 %v1503, 127
    %v1505 = vand.u32 2147483647, %v350
    %v1506 = vand.u32 %v1505, 8388607
    %v1507 = vor.u32 %v1506, 8388608
    %v1508 = vsub.s32 0, %v1507
    %v1509 = vadd.s32 %v1504, 1
    %vm1510 = vcmp.gt.s32.totalorder %v1509, 0
    %v1511 = vsel %vm1510, %v1509, 0
    %v1512 = vshrl.u32 %v1511, 5
    %v1513 = vand.u32 %v1511, 31
    %v1514 = vsub.s32 32, %v1513
    %v1515 = vshrl.u32 683565275, %v1514
    %v1516 = vshll.u32 683565275, %v1513
    %v1517 = vshrl.u32 2475754826, %v1514
    %v1518 = vor.u32 %v1516, %v1517
    %v1519 = vshll.u32 2475754826, %v1513
    %v1520 = vshrl.u32 2131351028, %v1514
    %v1521 = vor.u32 %v1519, %v1520
    %v1522 = vshll.u32 2131351028, %v1513
    %v1523 = vshrl.u32 2102212464, %v1514
    %v1524 = vor.u32 %v1522, %v1523
    %v1525 = vshll.u32 2102212464, %v1513
    %v1526 = vshrl.u32 920167782, %v1514
    %v1527 = vor.u32 %v1525, %v1526
    %v1528 = vshll.u32 920167782, %v1513
    %v1529 = vshrl.u32 1326507024, %v1514
    %v1530 = vor.u32 %v1528, %v1529
    %vm1531 = vcmp.lt.s32.totalorder %v1512, 1
    %vm1532 = vcmp.lt.s32.totalorder %v1512, 2
    %vm1533 = vcmp.lt.s32.totalorder %v1512, 3
    %vm1534 = vcmp.lt.s32.totalorder %v1512, 4
    %v1535 = vsel %vm1531, %v1515, %v1518
    %v1536 = vsel %vm1534, %v1524, 2102212464
    %v1537 = vsel %vm1533, %v1521, %v1536
    %v1538 = vsel %vm1532, %v1535, %v1537
    %v1539 = vsel %vm1531, %v1518, %v1521
    %v1540 = vsel %vm1534, %v1527, 920167782
    %v1541 = vsel %vm1533, %v1524, %v1540
    %v1542 = vsel %vm1532, %v1539, %v1541
    %v1543 = vsel %vm1531, %v1521, %v1524
    %v1544 = vsel %vm1534, %v1530, 1326507024
    %v1545 = vsel %vm1533, %v1527, %v1544
    %v1546 = vsel %vm1532, %v1543, %v1545
    %v1547 = vshll.u32 %v1507, 8
    %v1548 = vmul.u32.u64.compose %v1547, %v1546
    %v1549 = vextract.low.u32 %v1548
    %v1550 = vextract.high.u32 %v1548
    %v1551 = vmul.u32.u64.compose %v1547, %v1542
    %v1552 = vextract.low.u32 %v1551
    %v1553 = vextract.high.u32 %v1551
    %v1554 = vmul.u32 %v1547, %v1538
    %v1555 = vadd.s32 %v1550, %v1552
    %vm1556 = vc.u32 %v1550, %v1552
    %v1557 = vadd.s32 %v1553, 1
    %v1558 = vsel %vm1556, %v1557, %v1553
    %v1559 = vadd.s32 %v1554, %v1558
    %v1560 = vadd.s32 %v1559, 536870912
    %v1561 = vshrl.u32 %v1560, 30
    %v1562 = vshll.u32 %v1561, 30
    %v1563 = vsub.s32 %v1559, %v1562
    %vm1564 = vcmp.lt.s32.totalorder %v1563, 0
    %v1565 = vsub.s32 0, %v1563
    %v1566 = vsel %vm1564, %v1565, %v1563
    %v1567 = vclz %v1566
    %v1568 = vsub.s32 %v1567, 2
    %vm1569 = vcmp.gt.s32.totalorder 0, %v1568
    %v1570 = vsel %vm1569, 0, %v1568
    %v1571 = vsub.s32 32, %v1570
    %v1572 = vshll.u32 %v1563, %v1570
    %v1573 = vshrl.u32 %v1555, %v1571
    %v1574 = vor.u32 %v1572, %v1573
    %v1575 = vsub.s32 4294967266, %v1570
    %v1576 = vadd.s32 %v1575, 127
    %v1577 = vshll.u32 %v1576, 23
    %v1578 = vor.u32 4788187, %v1577
    %v1579 = vand.u32 2147483647, %v1578
    %v1581 = vcvt.s32.f32 %v1574
    %v1582 = vmul.f32 %v1581, %v1579
    %v1583 = vxor.u32 %v1582, 2147483648
    %v1584 = vsel %vm1501, %v1583, %v1582
    %v1585 = vsub.s32 4, %v1561
    %v1586 = vsel %vm1501, %v1585, %v1561
    %v1587 = vsel %vm1500, %v350, %v1584
    %v1588 = vsel %vm1500, 0, %v1586
    %v1589 = vcosq.f32.pop %v1587
    %v1590 = vsinq.f32.pop %v1587
    %vm1591 = vweird.f32 %v350
    %v1592 = vadd.s32 %v1588, 3
    %v1593 = vand.u32 %v1592, 3
    %vm1594 = vcmp.lt.s32.totalorder %v1593, 2
    %vm1595 = vcmp.eq.s32.totalorder %v1593, 0
    %v1596 = vxor.u32 %v1590, 2147483648
    %v1597 = vsel %vm1595, %v1589, %v1596
    %vm1598 = vcmp.eq.s32.totalorder %v1593, 2
    %v1599 = vxor.u32 %v1589, 2147483648
    %v1600 = vsel %vm1598, %v1599, %v1590
    %v1601 = vsel %vm1594, %v1597, %v1600
    %v1602 = vsel %vm1591, nan, %v1601
    %v1603 = vand.u32 2147483647, %v351
    %vm1604 = vcmp.le.f32.partialorder %v1603, 0.7853982
    %vm1605 = vcmp.lt.s32.totalorder %v351, 0
    %v1606 = vand.u32 %v351, 2139095040
    %v1607 = vshrl.u32 %v1606, 23
    %v1608 = vsub.s32 %v1607, 127
    %v1609 = vand.u32 2147483647, %v351
    %v1610 = vand.u32 %v1609, 8388607
    %v1611 = vor.u32 %v1610, 8388608
    %v1612 = vsub.s32 0, %v1611
    %v1613 = vadd.s32 %v1608, 1
    %vm1614 = vcmp.gt.s32.totalorder %v1613, 0
    %v1615 = vsel %vm1614, %v1613, 0
    %v1616 = vshrl.u32 %v1615, 5
    %v1617 = vand.u32 %v1615, 31
    %v1618 = vsub.s32 32, %v1617
    %v1619 = vshrl.u32 683565275, %v1618
    %v1620 = vshll.u32 683565275, %v1617
    %v1621 = vshrl.u32 2475754826, %v1618
    %v1622 = vor.u32 %v1620, %v1621
    %v1623 = vshll.u32 2475754826, %v1617
    %v1624 = vshrl.u32 2131351028, %v1618
    %v1625 = vor.u32 %v1623, %v1624
    %v1626 = vshll.u32 2131351028, %v1617
    %v1627 = vshrl.u32 2102212464, %v1618
    %v1628 = vor.u32 %v1626, %v1627
    %v1629 = vshll.u32 2102212464, %v1617
    %v1630 = vshrl.u32 920167782, %v1618
    %v1631 = vor.u32 %v1629, %v1630
    %v1632 = vshll.u32 920167782, %v1617
    %v1633 = vshrl.u32 1326507024, %v1618
    %v1634 = vor.u32 %v1632, %v1633
    %vm1635 = vcmp.lt.s32.totalorder %v1616, 1
    %vm1636 = vcmp.lt.s32.totalorder %v1616, 2
    %vm1637 = vcmp.lt.s32.totalorder %v1616, 3
    %vm1638 = vcmp.lt.s32.totalorder %v1616, 4
    %v1639 = vsel %vm1635, %v1619, %v1622
    %v1640 = vsel %vm1638, %v1628, 2102212464
    %v1641 = vsel %vm1637, %v1625, %v1640
    %v1642 = vsel %vm1636, %v1639, %v1641
    %v1643 = vsel %vm1635, %v1622, %v1625
    %v1644 = vsel %vm1638, %v1631, 920167782
    %v1645 = vsel %vm1637, %v1628, %v1644
    %v1646 = vsel %vm1636, %v1643, %v1645
    %v1647 = vsel %vm1635, %v1625, %v1628
    %v1648 = vsel %vm1638, %v1634, 1326507024
    %v1649 = vsel %vm1637, %v1631, %v1648
    %v1650 = vsel %vm1636, %v1647, %v1649
    %v1651 = vshll.u32 %v1611, 8
    %v1652 = vmul.u32.u64.compose %v1651, %v1650
    %v1653 = vextract.low.u32 %v1652
    %v1654 = vextract.high.u32 %v1652
    %v1655 = vmul.u32.u64.compose %v1651, %v1646
    %v1656 = vextract.low.u32 %v1655
    %v1657 = vextract.high.u32 %v1655
    %v1658 = vmul.u32 %v1651, %v1642
    %v1659 = vadd.s32 %v1654, %v1656
    %vm1660 = vc.u32 %v1654, %v1656
    %v1661 = vadd.s32 %v1657, 1
    %v1662 = vsel %vm1660, %v1661, %v1657
    %v1663 = vadd.s32 %v1658, %v1662
    %v1664 = vadd.s32 %v1663, 536870912
    %v1665 = vshrl.u32 %v1664, 30
    %v1666 = vshll.u32 %v1665, 30
    %v1667 = vsub.s32 %v1663, %v1666
    %vm1668 = vcmp.lt.s32.totalorder %v1667, 0
    %v1669 = vsub.s32 0, %v1667
    %v1670 = vsel %vm1668, %v1669, %v1667
    %v1671 = vclz %v1670
    %v1672 = vsub.s32 %v1671, 2
    %vm1673 = vcmp.gt.s32.totalorder 0, %v1672
    %v1674 = vsel %vm1673, 0, %v1672
    %v1675 = vsub.s32 32, %v1674
    %v1676 = vshll.u32 %v1667, %v1674
    %v1677 = vshrl.u32 %v1659, %v1675
    %v1678 = vor.u32 %v1676, %v1677
    %v1679 = vsub.s32 4294967266, %v1674
    %v1680 = vadd.s32 %v1679, 127
    %v1681 = vshll.u32 %v1680, 23
    %v1682 = vor.u32 4788187, %v1681
    %v1683 = vand.u32 2147483647, %v1682
    %v1685 = vcvt.s32.f32 %v1678
    %v1686 = vmul.f32 %v1685, %v1683
    %v1687 = vxor.u32 %v1686, 2147483648
    %v1688 = vsel %vm1605, %v1687, %v1686
    %v1689 = vsub.s32 4, %v1665
    %v1690 = vsel %vm1605, %v1689, %v1665
    %v1691 = vsel %vm1604, %v351, %v1688
    %v1692 = vsel %vm1604, 0, %v1690
    %v1693 = vcosq.f32.pop %v1691
    %v1694 = vsinq.f32.pop %v1691
    %vm1695 = vweird.f32 %v351
    %v1696 = vadd.s32 %v1692, 3
    %v1697 = vand.u32 %v1696, 3
    %vm1698 = vcmp.lt.s32.totalorder %v1697, 2
    %vm1699 = vcmp.eq.s32.totalorder %v1697, 0
    %v1700 = vxor.u32 %v1694, 2147483648
    %v1701 = vsel %vm1699, %v1693, %v1700
    %vm1702 = vcmp.eq.s32.totalorder %v1697, 2
    %v1703 = vxor.u32 %v1693, 2147483648
    %v1704 = vsel %vm1702, %v1703, %v1694
    %v1705 = vsel %vm1698, %v1701, %v1704
    %v1706 = vsel %vm1695, nan, %v1705
    %v1707 = vand.u32 2147483647, %v352
    %vm1708 = vcmp.le.f32.partialorder %v1707, 0.7853982
    %vm1709 = vcmp.lt.s32.totalorder %v352, 0
    %v1710 = vand.u32 %v352, 2139095040
    %v1711 = vshrl.u32 %v1710, 23
    %v1712 = vsub.s32 %v1711, 127
    %v1713 = vand.u32 2147483647, %v352
    %v1714 = vand.u32 %v1713, 8388607
    %v1715 = vor.u32 %v1714, 8388608
    %v1716 = vsub.s32 0, %v1715
    %v1717 = vadd.s32 %v1712, 1
    %vm1718 = vcmp.gt.s32.totalorder %v1717, 0
    %v1719 = vsel %vm1718, %v1717, 0
    %v1720 = vshrl.u32 %v1719, 5
    %v1721 = vand.u32 %v1719, 31
    %v1722 = vsub.s32 32, %v1721
    %v1723 = vshrl.u32 683565275, %v1722
    %v1724 = vshll.u32 683565275, %v1721
    %v1725 = vshrl.u32 2475754826, %v1722
    %v1726 = vor.u32 %v1724, %v1725
    %v1727 = vshll.u32 2475754826, %v1721
    %v1728 = vshrl.u32 2131351028, %v1722
    %v1729 = vor.u32 %v1727, %v1728
    %v1730 = vshll.u32 2131351028, %v1721
    %v1731 = vshrl.u32 2102212464, %v1722
    %v1732 = vor.u32 %v1730, %v1731
    %v1733 = vshll.u32 2102212464, %v1721
    %v1734 = vshrl.u32 920167782, %v1722
    %v1735 = vor.u32 %v1733, %v1734
    %v1736 = vshll.u32 920167782, %v1721
    %v1737 = vshrl.u32 1326507024, %v1722
    %v1738 = vor.u32 %v1736, %v1737
    %vm1739 = vcmp.lt.s32.totalorder %v1720, 1
    %vm1740 = vcmp.lt.s32.totalorder %v1720, 2
    %vm1741 = vcmp.lt.s32.totalorder %v1720, 3
    %vm1742 = vcmp.lt.s32.totalorder %v1720, 4
    %v1743 = vsel %vm1739, %v1723, %v1726
    %v1744 = vsel %vm1742, %v1732, 2102212464
    %v1745 = vsel %vm1741, %v1729, %v1744
    %v1746 = vsel %vm1740, %v1743, %v1745
    %v1747 = vsel %vm1739, %v1726, %v1729
    %v1748 = vsel %vm1742, %v1735, 920167782
    %v1749 = vsel %vm1741, %v1732, %v1748
    %v1750 = vsel %vm1740, %v1747, %v1749
    %v1751 = vsel %vm1739, %v1729, %v1732
    %v1752 = vsel %vm1742, %v1738, 1326507024
    %v1753 = vsel %vm1741, %v1735, %v1752
    %v1754 = vsel %vm1740, %v1751, %v1753
    %v1755 = vshll.u32 %v1715, 8
    %v1756 = vmul.u32.u64.compose %v1755, %v1754
    %v1757 = vextract.low.u32 %v1756
    %v1758 = vextract.high.u32 %v1756
    %v1759 = vmul.u32.u64.compose %v1755, %v1750
    %v1760 = vextract.low.u32 %v1759
    %v1761 = vextract.high.u32 %v1759
    %v1762 = vmul.u32 %v1755, %v1746
    %v1763 = vadd.s32 %v1758, %v1760
    %vm1764 = vc.u32 %v1758, %v1760
    %v1765 = vadd.s32 %v1761, 1
    %v1766 = vsel %vm1764, %v1765, %v1761
    %v1767 = vadd.s32 %v1762, %v1766
    %v1768 = vadd.s32 %v1767, 536870912
    %v1769 = vshrl.u32 %v1768, 30
    %v1770 = vshll.u32 %v1769, 30
    %v1771 = vsub.s32 %v1767, %v1770
    %vm1772 = vcmp.lt.s32.totalorder %v1771, 0
    %v1773 = vsub.s32 0, %v1771
    %v1774 = vsel %vm1772, %v1773, %v1771
    %v1775 = vclz %v1774
    %v1776 = vsub.s32 %v1775, 2
    %vm1777 = vcmp.gt.s32.totalorder 0, %v1776
    %v1778 = vsel %vm1777, 0, %v1776
    %v1779 = vsub.s32 32, %v1778
    %v1780 = vshll.u32 %v1771, %v1778
    %v1781 = vshrl.u32 %v1763, %v1779
    %v1782 = vor.u32 %v1780, %v1781
    %v1783 = vsub.s32 4294967266, %v1778
    %v1784 = vadd.s32 %v1783, 127
    %v1785 = vshll.u32 %v1784, 23
    %v1786 = vor.u32 4788187, %v1785
    %v1787 = vand.u32 2147483647, %v1786
    %v1789 = vcvt.s32.f32 %v1782
    %v1790 = vmul.f32 %v1789, %v1787
    %v1791 = vxor.u32 %v1790, 2147483648
    %v1792 = vsel %vm1709, %v1791, %v1790
    %v1793 = vsub.s32 4, %v1769
    %v1794 = vsel %vm1709, %v1793, %v1769
    %v1795 = vsel %vm1708, %v352, %v1792
    %v1796 = vsel %vm1708, 0, %v1794
    %v1797 = vcosq.f32.pop %v1795
    %v1798 = vsinq.f32.pop %v1795
    %vm1799 = vweird.f32 %v352
    %v1800 = vadd.s32 %v1796, 3
    %v1801 = vand.u32 %v1800, 3
    %vm1802 = vcmp.lt.s32.totalorder %v1801, 2
    %vm1803 = vcmp.eq.s32.totalorder %v1801, 0
    %v1804 = vxor.u32 %v1798, 2147483648
    %v1805 = vsel %vm1803, %v1797, %v1804
    %vm1806 = vcmp.eq.s32.totalorder %v1801, 2
    %v1807 = vxor.u32 %v1797, 2147483648
    %v1808 = vsel %vm1806, %v1807, %v1798
    %v1809 = vsel %vm1802, %v1805, %v1808
    %v1810 = vsel %vm1799, nan, %v1809
    %v1811 = vand.u32 2147483647, %v353
    %vm1812 = vcmp.le.f32.partialorder %v1811, 0.7853982
    %vm1813 = vcmp.lt.s32.totalorder %v353, 0
    %v1814 = vand.u32 %v353, 2139095040
    %v1815 = vshrl.u32 %v1814, 23
    %v1816 = vsub.s32 %v1815, 127
    %v1817 = vand.u32 2147483647, %v353
    %v1818 = vand.u32 %v1817, 8388607
    %v1819 = vor.u32 %v1818, 8388608
    %v1820 = vsub.s32 0, %v1819
    %v1821 = vadd.s32 %v1816, 1
    %vm1822 = vcmp.gt.s32.totalorder %v1821, 0
    %v1823 = vsel %vm1822, %v1821, 0
    %v1824 = vshrl.u32 %v1823, 5
    %v1825 = vand.u32 %v1823, 31
    %v1826 = vsub.s32 32, %v1825
    %v1827 = vshrl.u32 683565275, %v1826
    %v1828 = vshll.u32 683565275, %v1825
    %v1829 = vshrl.u32 2475754826, %v1826
    %v1830 = vor.u32 %v1828, %v1829
    %v1831 = vshll.u32 2475754826, %v1825
    %v1832 = vshrl.u32 2131351028, %v1826
    %v1833 = vor.u32 %v1831, %v1832
    %v1834 = vshll.u32 2131351028, %v1825
    %v1835 = vshrl.u32 2102212464, %v1826
    %v1836 = vor.u32 %v1834, %v1835
    %v1837 = vshll.u32 2102212464, %v1825
    %v1838 = vshrl.u32 920167782, %v1826
    %v1839 = vor.u32 %v1837, %v1838
    %v1840 = vshll.u32 920167782, %v1825
    %v1841 = vshrl.u32 1326507024, %v1826
    %v1842 = vor.u32 %v1840, %v1841
    %vm1843 = vcmp.lt.s32.totalorder %v1824, 1
    %vm1844 = vcmp.lt.s32.totalorder %v1824, 2
    %vm1845 = vcmp.lt.s32.totalorder %v1824, 3
    %vm1846 = vcmp.lt.s32.totalorder %v1824, 4
    %v1847 = vsel %vm1843, %v1827, %v1830
    %v1848 = vsel %vm1846, %v1836, 2102212464
    %v1849 = vsel %vm1845, %v1833, %v1848
    %v1850 = vsel %vm1844, %v1847, %v1849
    %v1851 = vsel %vm1843, %v1830, %v1833
    %v1852 = vsel %vm1846, %v1839, 920167782
    %v1853 = vsel %vm1845, %v1836, %v1852
    %v1854 = vsel %vm1844, %v1851, %v1853
    %v1855 = vsel %vm1843, %v1833, %v1836
    %v1856 = vsel %vm1846, %v1842, 1326507024
    %v1857 = vsel %vm1845, %v1839, %v1856
    %v1858 = vsel %vm1844, %v1855, %v1857
    %v1859 = vshll.u32 %v1819, 8
    %v1860 = vmul.u32.u64.compose %v1859, %v1858
    %v1861 = vextract.low.u32 %v1860
    %v1862 = vextract.high.u32 %v1860
    %v1863 = vmul.u32.u64.compose %v1859, %v1854
    %v1864 = vextract.low.u32 %v1863
    %v1865 = vextract.high.u32 %v1863
    %v1866 = vmul.u32 %v1859, %v1850
    %v1867 = vadd.s32 %v1862, %v1864
    %vm1868 = vc.u32 %v1862, %v1864
    %v1869 = vadd.s32 %v1865, 1
    %v1870 = vsel %vm1868, %v1869, %v1865
    %v1871 = vadd.s32 %v1866, %v1870
    %v1872 = vadd.s32 %v1871, 536870912
    %v1873 = vshrl.u32 %v1872, 30
    %v1874 = vshll.u32 %v1873, 30
    %v1875 = vsub.s32 %v1871, %v1874
    %vm1876 = vcmp.lt.s32.totalorder %v1875, 0
    %v1877 = vsub.s32 0, %v1875
    %v1878 = vsel %vm1876, %v1877, %v1875
    %v1879 = vclz %v1878
    %v1880 = vsub.s32 %v1879, 2
    %vm1881 = vcmp.gt.s32.totalorder 0, %v1880
    %v1882 = vsel %vm1881, 0, %v1880
    %v1883 = vsub.s32 32, %v1882
    %v1884 = vshll.u32 %v1875, %v1882
    %v1885 = vshrl.u32 %v1867, %v1883
    %v1886 = vor.u32 %v1884, %v1885
    %v1887 = vsub.s32 4294967266, %v1882
    %v1888 = vadd.s32 %v1887, 127
    %v1889 = vshll.u32 %v1888, 23
    %v1890 = vor.u32 4788187, %v1889
    %v1891 = vand.u32 2147483647, %v1890
    %v1893 = vcvt.s32.f32 %v1886
    %v1894 = vmul.f32 %v1893, %v1891
    %v1895 = vxor.u32 %v1894, 2147483648
    %v1896 = vsel %vm1813, %v1895, %v1894
    %v1897 = vsub.s32 4, %v1873
    %v1898 = vsel %vm1813, %v1897, %v1873
    %v1899 = vsel %vm1812, %v353, %v1896
    %v1900 = vsel %vm1812, 0, %v1898
    %v1901 = vcosq.f32.pop %v1899
    %v1902 = vsinq.f32.pop %v1899
    %vm1903 = vweird.f32 %v353
    %v1904 = vadd.s32 %v1900, 3
    %v1905 = vand.u32 %v1904, 3
    %vm1906 = vcmp.lt.s32.totalorder %v1905, 2
    %vm1907 = vcmp.eq.s32.totalorder %v1905, 0
    %v1908 = vxor.u32 %v1902, 2147483648
    %v1909 = vsel %vm1907, %v1901, %v1908
    %vm1910 = vcmp.eq.s32.totalorder %v1905, 2
    %v1911 = vxor.u32 %v1901, 2147483648
    %v1912 = vsel %vm1910, %v1911, %v1902
    %v1913 = vsel %vm1906, %v1909, %v1912
    %v1914 = vsel %vm1903, nan, %v1913
    %v1915 = vand.u32 2147483647, %v354
    %vm1916 = vcmp.le.f32.partialorder %v1915, 0.7853982
    %vm1917 = vcmp.lt.s32.totalorder %v354, 0
    %v1918 = vand.u32 %v354, 2139095040
    %v1919 = vshrl.u32 %v1918, 23
    %v1920 = vsub.s32 %v1919, 127
    %v1921 = vand.u32 2147483647, %v354
    %v1922 = vand.u32 %v1921, 8388607
    %v1923 = vor.u32 %v1922, 8388608
    %v1924 = vsub.s32 0, %v1923
    %v1925 = vadd.s32 %v1920, 1
    %vm1926 = vcmp.gt.s32.totalorder %v1925, 0
    %v1927 = vsel %vm1926, %v1925, 0
    %v1928 = vshrl.u32 %v1927, 5
    %v1929 = vand.u32 %v1927, 31
    %v1930 = vsub.s32 32, %v1929
    %v1931 = vshrl.u32 683565275, %v1930
    %v1932 = vshll.u32 683565275, %v1929
    %v1933 = vshrl.u32 2475754826, %v1930
    %v1934 = vor.u32 %v1932, %v1933
    %v1935 = vshll.u32 2475754826, %v1929
    %v1936 = vshrl.u32 2131351028, %v1930
    %v1937 = vor.u32 %v1935, %v1936
    %v1938 = vshll.u32 2131351028, %v1929
    %v1939 = vshrl.u32 2102212464, %v1930
    %v1940 = vor.u32 %v1938, %v1939
    %v1941 = vshll.u32 2102212464, %v1929
    %v1942 = vshrl.u32 920167782, %v1930
    %v1943 = vor.u32 %v1941, %v1942
    %v1944 = vshll.u32 920167782, %v1929
    %v1945 = vshrl.u32 1326507024, %v1930
    %v1946 = vor.u32 %v1944, %v1945
    %vm1947 = vcmp.lt.s32.totalorder %v1928, 1
    %vm1948 = vcmp.lt.s32.totalorder %v1928, 2
    %vm1949 = vcmp.lt.s32.totalorder %v1928, 3
    %vm1950 = vcmp.lt.s32.totalorder %v1928, 4
    %v1951 = vsel %vm1947, %v1931, %v1934
    %v1952 = vsel %vm1950, %v1940, 2102212464
    %v1953 = vsel %vm1949, %v1937, %v1952
    %v1954 = vsel %vm1948, %v1951, %v1953
    %v1955 = vsel %vm1947, %v1934, %v1937
    %v1956 = vsel %vm1950, %v1943, 920167782
    %v1957 = vsel %vm1949, %v1940, %v1956
    %v1958 = vsel %vm1948, %v1955, %v1957
    %v1959 = vsel %vm1947, %v1937, %v1940
    %v1960 = vsel %vm1950, %v1946, 1326507024
    %v1961 = vsel %vm1949, %v1943, %v1960
    %v1962 = vsel %vm1948, %v1959, %v1961
    %v1963 = vshll.u32 %v1923, 8
    %v1964 = vmul.u32.u64.compose %v1963, %v1962
    %v1965 = vextract.low.u32 %v1964
    %v1966 = vextract.high.u32 %v1964
    %v1967 = vmul.u32.u64.compose %v1963, %v1958
    %v1968 = vextract.low.u32 %v1967
    %v1969 = vextract.high.u32 %v1967
    %v1970 = vmul.u32 %v1963, %v1954
    %v1971 = vadd.s32 %v1966, %v1968
    %vm1972 = vc.u32 %v1966, %v1968
    %v1973 = vadd.s32 %v1969, 1
    %v1974 = vsel %vm1972, %v1973, %v1969
    %v1975 = vadd.s32 %v1970, %v1974
    %v1976 = vadd.s32 %v1975, 536870912
    %v1977 = vshrl.u32 %v1976, 30
    %v1978 = vshll.u32 %v1977, 30
    %v1979 = vsub.s32 %v1975, %v1978
    %vm1980 = vcmp.lt.s32.totalorder %v1979, 0
    %v1981 = vsub.s32 0, %v1979
    %v1982 = vsel %vm1980, %v1981, %v1979
    %v1983 = vclz %v1982
    %v1984 = vsub.s32 %v1983, 2
    %vm1985 = vcmp.gt.s32.totalorder 0, %v1984
    %v1986 = vsel %vm1985, 0, %v1984
    %v1987 = vsub.s32 32, %v1986
    %v1988 = vshll.u32 %v1979, %v1986
    %v1989 = vshrl.u32 %v1971, %v1987
    %v1990 = vor.u32 %v1988, %v1989
    %v1991 = vsub.s32 4294967266, %v1986
    %v1992 = vadd.s32 %v1991, 127
    %v1993 = vshll.u32 %v1992, 23
    %v1994 = vor.u32 4788187, %v1993
    %v1995 = vand.u32 2147483647, %v1994
    %v1997 = vcvt.s32.f32 %v1990
    %v1998 = vmul.f32 %v1997, %v1995
    %v1999 = vxor.u32 %v1998, 2147483648
    %v2000 = vsel %vm1917, %v1999, %v1998
    %v2001 = vsub.s32 4, %v1977
    %v2002 = vsel %vm1917, %v2001, %v1977
    %v2003 = vsel %vm1916, %v354, %v2000
    %v2004 = vsel %vm1916, 0, %v2002
    %v2005 = vcosq.f32.pop %v2003
    %v2006 = vsinq.f32.pop %v2003
    %vm2007 = vweird.f32 %v354
    %v2008 = vadd.s32 %v2004, 3
    %v2009 = vand.u32 %v2008, 3
    %vm2010 = vcmp.lt.s32.totalorder %v2009, 2
    %vm2011 = vcmp.eq.s32.totalorder %v2009, 0
    %v2012 = vxor.u32 %v2006, 2147483648
    %v2013 = vsel %vm2011, %v2005, %v2012
    %vm2014 = vcmp.eq.s32.totalorder %v2009, 2
    %v2015 = vxor.u32 %v2005, 2147483648
    %v2016 = vsel %vm2014, %v2015, %v2006
    %v2017 = vsel %vm2010, %v2013, %v2016
    %v2018 = vsel %vm2007, nan, %v2017
    %v2019 = vmul.f32 %v297, %v1290
    %v2020 = vmul.f32 %v304, %v1394
    %v2021 = vmul.f32 %v311, %v1498
    %v2022 = vmul.f32 %v318, %v1602
    %v2023 = vmul.f32 %v325, %v1706
    %v2024 = vmul.f32 %v332, %v1810
    %v2025 = vmul.f32 %v339, %v1914
    %v2026 = vmul.f32 %v346, %v2018
    %v2027 = vld [vmem:[#allocation4] sm:$0xff]
    %v2028 = vld [vmem:[#allocation4 + $0x8] sm:$0xff]
    %v2029 = vld [vmem:[#allocation4 + $0x10] sm:$0xff]
    %v2030 = vld [vmem:[#allocation4 + $0x18] sm:$0xff]
    %v2031 = vld [vmem:[#allocation4 + $0x20] sm:$0xff]
    %v2032 = vld [vmem:[#allocation4 + $0x28] sm:$0xff]
    %v2033 = vld [vmem:[#allocation4 + $0x30] sm:$0xff]
    %v2034 = vld [vmem:[#allocation4 + $0x38] sm:$0xff]
    %v2035 = vmul.f32 %v1179, 0.005
    %v2036 = vmul.f32 %v1180, 0.005
    %v2037 = vmul.f32 %v1181, 0.005
    %v2038 = vmul.f32 %v1182, 0.005
    %v2039 = vmul.f32 %v1183, 0.005
    %v2040 = vmul.f32 %v1184, 0.005
    %v2041 = vmul.f32 %v1185, 0.005
    %v2042 = vmul.f32 %v1186, 0.005
    %v2043 = vadd.f32 %v2027, %v2035
    %v2044 = vadd.f32 %v2028, %v2036
    %v2045 = vadd.f32 %v2029, %v2037
    %v2046 = vadd.f32 %v2030, %v2038
    %v2047 = vadd.f32 %v2031, %v2039
    %v2048 = vadd.f32 %v2032, %v2040
    %v2049 = vadd.f32 %v2033, %v2041
    %v2050 = vadd.f32 %v2034, %v2042
    %2051 = vst [vmem:[#allocation7] sm:$0xff] %v2043
    %2052 = vst [vmem:[#allocation7 + $0x8] sm:$0xff] %v2044
    %2053 = vst [vmem:[#allocation7 + $0x10] sm:$0xff] %v2045
    %2054 = vst [vmem:[#allocation7 + $0x18] sm:$0xff] %v2046
    %2055 = vst [vmem:[#allocation7 + $0x20] sm:$0xff] %v2047
    %2056 = vst [vmem:[#allocation7 + $0x28] sm:$0xff] %v2048
    %2057 = vst [vmem:[#allocation7 + $0x30] sm:$0xff] %v2049
    %2058 = vst [vmem:[#allocation7 + $0x38] sm:$0xff] %v2050
    %v2059 = vld [vmem:[#allocation4 + $0x40] sm:$0xff]
    %v2060 = vld [vmem:[#allocation4 + $0x48] sm:$0xff]
    %v2061 = vld [vmem:[#allocation4 + $0x50] sm:$0xff]
    %v2062 = vld [vmem:[#allocation4 + $0x58] sm:$0xff]
    %v2063 = vld [vmem:[#allocation4 + $0x60] sm:$0xff]
    %v2064 = vld [vmem:[#allocation4 + $0x68] sm:$0xff]
    %v2065 = vld [vmem:[#allocation4 + $0x70] sm:$0xff]
    %v2066 = vld [vmem:[#allocation4 + $0x78] sm:$0xff]
    %v2067 = vmul.f32 %v2019, 0.005
    %v2068 = vmul.f32 %v2020, 0.005
    %v2069 = vmul.f32 %v2021, 0.005
    %v2070 = vmul.f32 %v2022, 0.005
    %v2071 = vmul.f32 %v2023, 0.005
    %v2072 = vmul.f32 %v2024, 0.005
    %v2073 = vmul.f32 %v2025, 0.005
    %v2074 = vmul.f32 %v2026, 0.005
    %v2075 = vadd.f32 %v2059, %v2067
    %v2076 = vadd.f32 %v2060, %v2068
    %v2077 = vadd.f32 %v2061, %v2069
    %v2078 = vadd.f32 %v2062, %v2070
    %v2079 = vadd.f32 %v2063, %v2071
    %v2080 = vadd.f32 %v2064, %v2072
    %v2081 = vadd.f32 %v2065, %v2073
    %v2082 = vadd.f32 %v2066, %v2074
    %2083 = vst [vmem:[#allocation7 + $0x40] sm:$0xff] %v2075
    %2084 = vst [vmem:[#allocation7 + $0x48] sm:$0xff] %v2076
    %2085 = vst [vmem:[#allocation7 + $0x50] sm:$0xff] %v2077
    %2086 = vst [vmem:[#allocation7 + $0x58] sm:$0xff] %v2078
    %2087 = vst [vmem:[#allocation7 + $0x60] sm:$0xff] %v2079
    %2088 = vst [vmem:[#allocation7 + $0x68] sm:$0xff] %v2080
    %2089 = vst [vmem:[#allocation7 + $0x70] sm:$0xff] %v2081
    %2090 = vst [vmem:[#allocation7 + $0x78] sm:$0xff] %v2082
    // Predicated region
    $region10: #{tpu_custom_call.1} parent=1 // pred_check
      _
    $region11: #{tpu_custom_call.1} parent=1 // pred_check_branch
      %2092 = sbr.rel (0) target = $region13
    $region12: #{tpu_custom_call.1} parent=1 // pred_region
      %s2094 = ssub.s32 2048, 2048
      %2095 = vsyncadd [#allocation6], %s2094
      %s2096 = sshll.u32 [#allocation7], 4
      %s2097 = int_to_ptr.vmem [resolvable:$true] %s2096
      %2102 = dma.vmem_to_hbm [thread:$0]  %s2097, 2048, %s2, [#allocation6], 1024, 1024, 64
    $region13: #{tpu_custom_call.1} parent=1 // pred_fallthru
      _
    // Predicated region
    $region14: #{tpu_custom_call.1} parent=1 // pred_check
      _
    $region15: #{tpu_custom_call.1} parent=1 // pred_check_branch
      %2104 = sbr.rel (0) target = $region17
    $region16: #{tpu_custom_call.1} parent=1 // pred_region
      %2105 = dma.done [#allocation6], 2048
    $region17: #{tpu_custom_call.1} parent=1 // pred_fallthru
      _
    %2106 = vsyncpa [#allocation5], 1
    %2107 = vsyncpa [#allocation6], 1

</llo_original>
